<compile_context>
chip_gen: v5e
topology: v5e:2x2
jax: 0.10.0
libtpu: 0.0.40
codegen_flags: <defaults>
</compile_context>

<pallas_src>
import functools
import math

import jax
import jax.numpy as jnp
from jax.experimental import pallas as pl
from jax.experimental.pallas import tpu as pltpu


def lstm_mlp_kernel(lens_ref, gx_ref, whh_ref, w3_ref, b3_ref, w4_ref, b4_ref,
                    out_ref, h_scr, c_scr, *, unroll):
    """One (batch-tile, time-chunk) grid step of LSTM + fc3/ReLU + fc4/sigmoid.

    lens_ref : (1, Bpt)   int32  per-column sequence lengths
    gx_ref   : (Tc, 4H, Bpt)     hoisted x@Wih^T + b, gate order [i, f, o, g], transposed
    whh_ref  : (4H, H)    bf16   recurrent weights (reordered, transposed layout)
    w3_ref   : (F3, H)    bf16   fc3 weight;  b3_ref (F3, 1) f32
    w4_ref   : (1, F3)    bf16   fc4 weight;  b4_ref (1, 1)  f32
    out_ref  : (Tc, 1, Bpt) f32  sigmoid outputs, lane-dense in batch
    h_scr/c_scr : (H, Bpt) f32   LSTM state carried across time chunks
    """
    Tc = gx_ref.shape[0]
    H = whh_ref.shape[1]
    ci = pl.program_id(1)

    @pl.when(ci == 0)
    def _():
        h_scr[...] = jnp.zeros_like(h_scr)
        c_scr[...] = jnp.zeros_like(c_scr)

    whh = whh_ref[...]                      # hoisted loads (stay in vregs)
    w3 = w3_ref[...]
    b3 = b3_ref[...]
    w4 = w4_ref[...]
    b4 = b4_ref[...]
    lens = lens_ref[...]                    # (1, Bpt) int32
    t0 = ci * Tc

    def step(t, carry):
        h, c = carry                                                     # (H, Bpt) f32
        g = gx_ref[t] + jnp.dot(whh, h.astype(jnp.bfloat16),
                                preferred_element_type=jnp.float32)      # (4H, Bpt)

        # gate order [i, f, o, g]: static sublane slices (no lane rotates);
        # one sigmoid pass over 3H rows + one tanh pass over H rows.
        s = jax.nn.sigmoid(g[:3 * H, :])
        i_g = s[0:H]
        f_g = s[H:2 * H]
        o_g = s[2 * H:3 * H]
        g_g = jnp.tanh(g[3 * H:, :])

        c_new = f_g * c + i_g * g_g
        h_new = o_g * jnp.tanh(c_new)

        # packed-sequence semantics: state advances only while t < length,
        # padded positions of the LSTM output are zero.
        keep = (t0 + t) < lens                                           # (1, Bpt)
        h = jnp.where(keep, h_new, h)
        c = jnp.where(keep, c_new, c)
        h_out = jnp.where(keep, h_new, 0.0)                              # (H, Bpt)

        # fused MLP head; independent of the recurrence chain, so with a modest
        # unroll it overlaps the next step's (idle-heavy) MXU/EUP work.
        z = jnp.dot(w3, h_out.astype(jnp.bfloat16),
                    preferred_element_type=jnp.float32) + b3             # (F3, Bpt)
        z = jnp.maximum(z, 0.0)
        y = jnp.dot(w4, z.astype(jnp.bfloat16),
                    preferred_element_type=jnp.float32) + b4             # (1, Bpt)
        out_ref[t] = jax.nn.sigmoid(y)
        return h, c

    h, c = jax.lax.fori_loop(0, Tc, step, (h_scr[...], c_scr[...]), unroll=unroll)
    h_scr[...] = h
    c_scr[...] = c


def lstm_forward(x, mask, params, *, time_chunk=4, unroll=4):
    """x: (B, T, F) float32, mask: (B, T) {0,1} prefix mask. Returns (B, T, 1).

    pad_packed_sequence's truncation to max(lengths) is left to the caller so this
    wrapper stays jit-friendly (no device->host sync); padded positions hold
    sigmoid(relu(b3) @ w4^T + b4), exactly like the PyTorch module's padded region.
    """
    B, T, F = x.shape
    H = params["whh_r"].shape[1]
    F3 = params["w3"].shape[0]

    # Batch padding: f32 sublane height (8) minimum; 128-wide lane tiles once the
    # batch is large enough to fill the per-step matmul / split across cores.
    if B > 128:
        Bp = ((B + 127) // 128) * 128
        Bpt = 128
    else:
        Bp = max(8, ((B + 7) // 8) * 8)
        Bpt = Bp

    Tc = min(time_chunk, T)
    Tp = ((T + Tc - 1) // Tc) * Tc

    xp = jnp.pad(x.astype(jnp.float32), ((0, Bp - B), (0, 0), (0, 0)))
    lengths = jnp.sum(mask.astype(jnp.int32), axis=1)
    lens = jnp.pad(lengths, (0, Bp - B))[None, :]                        # (1, Bp)

    # Hoisted input projection (plain XLA), gate-reordered and transposed so the
    # kernel's per-step tensors are already (gates/hidden, batch) lane-dense.
    x_tbf = jnp.transpose(xp, (1, 0, 2))                                 # (T, Bp, F)
    gx = jnp.einsum('gf,tbf->tgb', params["wih_r"], x_tbf) \
        + params["b_r"][None, :, None]                                   # (T, 4H, Bp)
    gx = jnp.pad(gx, ((0, Tp - T), (0, 0), (0, 0)))

    n_bt, n_tc = Bp // Bpt, Tp // Tc

    # Explicit scoped-VMEM budget with headroom for double-buffered gx/out chunks.
    lane = max(Bpt, 128)
    chunk_bytes = (Tc * 4 * H * lane + Tc * 8 * lane) * 4
    weight_bytes = (4 * H * max(H, 128) + F3 * max(H, 128) + F3 * 128 + 256) * 4
    vmem_limit = int(min(64 * 2**20,
                         max(16 * 2**20, 4 * chunk_bytes + 2 * weight_bytes)))

    out = pl.pallas_call(
        functools.partial(lstm_mlp_kernel, unroll=unroll),
        out_shape=jax.ShapeDtypeStruct((Tp, 1, Bp), jnp.float32),
        grid_spec=pltpu.PrefetchScalarGridSpec(
            num_scalar_prefetch=0,
            grid=(n_bt, n_tc),
            in_specs=[
                pl.BlockSpec((1, Bpt), lambda bi, ci: (0, bi)),              # lengths
                pl.BlockSpec((Tc, 4 * H, Bpt), lambda bi, ci: (ci, 0, bi)),  # gx chunk
                pl.BlockSpec((4 * H, H), lambda bi, ci: (0, 0)),             # Whh
                pl.BlockSpec((F3, H), lambda bi, ci: (0, 0)),                # W3
                pl.BlockSpec((F3, 1), lambda bi, ci: (0, 0)),                # b3
                pl.BlockSpec((1, F3), lambda bi, ci: (0, 0)),                # W4
                pl.BlockSpec((1, 1), lambda bi, ci: (0, 0)),                 # b4
            ],
            out_specs=pl.BlockSpec((Tc, 1, Bpt), lambda bi, ci: (ci, 0, bi)),
            scratch_shapes=[pltpu.VMEM((H, Bpt), jnp.float32),               # h carry
                            pltpu.VMEM((H, Bpt), jnp.float32)],              # c carry
        ),
        compiler_params=pltpu.CompilerParams(
            dimension_semantics=("parallel", "arbitrary"),
            vmem_limit_bytes=vmem_limit,
        ),
    )(lens, gx, params["whh_r"], params["w3"], params["b3_col"],
      params["w4"], params["b4_11"])

    out = out[:T, 0, :].T[:B]                                            # (B, T)
    return out[:, :, None]


def init_params_raw(key, num_features, hidden=32):
    """Deterministic synthetic parameters in torch.nn.LSTM / Linear layout."""
    ks = jax.random.split(key, 8)
    s_lstm = 1.0 / math.sqrt(hidden)
    w_ih = jax.random.uniform(ks[0], (4 * hidden, num_features), jnp.float32, -s_lstm, s_lstm)
    w_hh = jax.random.uniform(ks[1], (4 * hidden, hidden), jnp.float32, -s_lstm, s_lstm)
    b_ih = jax.random.uniform(ks[2], (4 * hidden,), jnp.float32, -s_lstm, s_lstm)
    b_hh = jax.random.uniform(ks[3], (4 * hidden,), jnp.float32, -s_lstm, s_lstm)
    s3 = 1.0 / math.sqrt(hidden)
    w3 = jax.random.uniform(ks[4], (32, hidden), jnp.float32, -s3, s3)
    b3 = jax.random.uniform(ks[5], (32,), jnp.float32, -s3, s3)
    s4 = 1.0 / math.sqrt(32)
    w4 = jax.random.uniform(ks[6], (1, 32), jnp.float32, -s4, s4)
    b4 = jax.random.uniform(ks[7], (1,), jnp.float32, -s4, s4)
    return {"w_ih": w_ih, "w_hh": w_hh, "b_ih": b_ih, "b_hh": b_hh,
            "w3": w3, "b3": b3, "w4": w4, "b4": b4}


def prepare_params(raw):
    """Gate reorder [i,f,g,o] -> [i,f,o,g]; transposed layouts; bf16 MXU operands."""
    H = raw["w_hh"].shape[1]

    def reorder(w):  # along axis 0 of a (4H, ...) tensor
        return jnp.concatenate([w[:2 * H], w[3 * H:4 * H], w[2 * H:3 * H]], axis=0)

    return {
        "wih_r": reorder(raw["w_ih"]),                        # (4H, F) f32, used in wrapper
        "whh_r": reorder(raw["w_hh"]).astype(jnp.bfloat16),   # (4H, H)
        "b_r": reorder(raw["b_ih"] + raw["b_hh"]),            # (4H,)  f32
        "w3": raw["w3"].astype(jnp.bfloat16),                 # (32, H)
        "b3_col": raw["b3"][:, None],                         # (32, 1) f32
        "w4": raw["w4"].astype(jnp.bfloat16),                 # (1, 32)
        "b4_11": raw["b4"][:, None],                          # (1, 1)  f32
    }


def reference_forward(x, mask, raw):
    """Pure-JAX f32 reference reproducing the PyTorch module (torch gate order i,f,g,o)."""
    B, T, F = x.shape
    H = raw["w_hh"].shape[1]
    b = raw["b_ih"] + raw["b_hh"]
    m = mask.astype(jnp.float32)

    def step(carry, inp):
        h, c = carry
        x_t, m_t = inp
        gates = x_t @ raw["w_ih"].T + h @ raw["w_hh"].T + b
        i_g = jax.nn.sigmoid(gates[:, 0:H])
        f_g = jax.nn.sigmoid(gates[:, H:2 * H])
        g_g = jnp.tanh(gates[:, 2 * H:3 * H])
        o_g = jax.nn.sigmoid(gates[:, 3 * H:4 * H])
        c_new = f_g * c + i_g * g_g
        h_new = o_g * jnp.tanh(c_new)
        m_ = m_t[:, None]
        h = m_ * h_new + (1.0 - m_) * h
        c = m_ * c_new + (1.0 - m_) * c
        return (h, c), m_ * h_new

    init = (jnp.zeros((B, H), jnp.float32), jnp.zeros((B, H), jnp.float32))
    _, hs = jax.lax.scan(step, init, (jnp.transpose(x, (1, 0, 2)), m.T))
    hs = jnp.transpose(hs, (1, 0, 2))                          # (B, T, H)
    z = jnp.maximum(hs @ raw["w3"].T + raw["b3"], 0.0)
    y = jax.nn.sigmoid(z @ raw["w4"].T + raw["b4"])
    return y                                                   # (B, T, 1)


if __name__ == "__main__":
    B, T, F, H = 2, 8, 8, 32
    key = jax.random.PRNGKey(0)
    kx, kp = jax.random.split(key)

    x = jax.random.normal(kx, (B, T, F), dtype=jnp.float32)
    lengths = jnp.array([8, 5], dtype=jnp.int32)
    mask = (jnp.arange(T)[None, :] < lengths[:, None]).astype(jnp.float32)  # (B, T)

    raw = init_params_raw(kp, F, H)
    params = prepare_params(raw)

    out = lstm_forward(x, mask, params)
    out = jax.block_until_ready(out)
    ref = reference_forward(x, mask, raw)

    assert out.shape == ref.shape == (B, T, 1)
    # pad_packed_sequence truncation to max(lengths) applied here (eager test harness).
    # TODO(synk): that truncation is the only part with no in-kernel equivalent
    # (host-side dynamic shape); everything else matches the PyTorch forward.
    t_max = int(jnp.max(jnp.sum(mask, axis=1)))
    # bf16 MXU operands (f32 accumulation / f32 h,c state) -> tolerance relaxed vs 1e-4.
    assert jnp.allclose(out[:, :t_max], ref[:, :t_max], rtol=2e-2, atol=2e-2), \
        "mismatch vs pure-JAX reference"

    print("KERNEL_OK")
</pallas_src>

<mosaic_0001>
module attributes {stable_mosaic.version = 11 : i64} {
  func.func @lstm_mlp_kernel(%arg0: i32, %arg1: i32, %arg2: memref<1x8xi32, #tpu.memory_space<vmem>>, %arg3: memref<4x128x8xf32, #tpu.memory_space<vmem>>, %arg4: memref<128x32xbf16, #tpu.memory_space<vmem>>, %arg5: memref<32x32xbf16, #tpu.memory_space<vmem>>, %arg6: memref<32x1xf32, #tpu.memory_space<vmem>>, %arg7: memref<1x32xbf16, #tpu.memory_space<vmem>>, %arg8: memref<1x1xf32, #tpu.memory_space<vmem>>, %arg9: memref<4x1x8xf32, #tpu.memory_space<vmem>>, %arg10: memref<32x8xf32, #tpu.memory_space<vmem>>, %arg11: memref<32x8xf32, #tpu.memory_space<vmem>>) attributes {dimension_semantics = [#tpu.dimension_semantics<parallel>, #tpu.dimension_semantics<arbitrary>], iteration_bounds = array<i64: 1, 2>, scalar_prefetch = 0 : i64, scratch_operands = 2 : i64, tpu.core_type = #tpu.core_type<tc>, window_params = [{transform_indices = @transform_0, window_bounds = array<i64: 1, 8>}, {transform_indices = @transform_1, window_bounds = array<i64: 4, 128, 8>}, {pipeline_mode = #tpu.pipeline_mode<synchronous>, transform_indices = @transform_2, window_bounds = array<i64: 128, 32>}, {pipeline_mode = #tpu.pipeline_mode<synchronous>, transform_indices = @transform_3, window_bounds = array<i64: 32, 32>}, {pipeline_mode = #tpu.pipeline_mode<synchronous>, transform_indices = @transform_4, window_bounds = array<i64: 32, 1>}, {pipeline_mode = #tpu.pipeline_mode<synchronous>, transform_indices = @transform_5, window_bounds = array<i64: 1, 32>}, {pipeline_mode = #tpu.pipeline_mode<synchronous>, transform_indices = @transform_6, window_bounds = array<i64: 1, 1>}, {transform_indices = @transform_7, window_bounds = array<i64: 4, 1, 8>}]} {
    %c0_i32 = arith.constant 0 : i32
    %0 = arith.cmpi eq, %arg1, %c0_i32 : i32
    %1 = arith.extui %0 : i1 to i32
    %c0_i32_0 = arith.constant 0 : i32
    %2 = arith.cmpi ne, %1, %c0_i32_0 : i32
    scf.if %2 {
      %cst_65 = arith.constant 0.000000e+00 : f32
      %230 = vector.broadcast %cst_65 : f32 to vector<32x8xf32>
      %c0_66 = arith.constant 0 : index
      %c0_67 = arith.constant 0 : index
      %231 = vector.load %arg10[%c0_66, %c0_67] : memref<32x8xf32, #tpu.memory_space<vmem>>, vector<32x8xf32>
      tpu.vector_store %arg10[%c0_66, %c0_67], %230 {strides = array<i32>} : memref<32x8xf32, #tpu.memory_space<vmem>>, vector<32x8xf32>,
      %cst_68 = arith.constant 0.000000e+00 : f32
      %232 = vector.broadcast %cst_68 : f32 to vector<32x8xf32>
      %c0_69 = arith.constant 0 : index
      %c0_70 = arith.constant 0 : index
      %233 = vector.load %arg11[%c0_69, %c0_70] : memref<32x8xf32, #tpu.memory_space<vmem>>, vector<32x8xf32>
      tpu.vector_store %arg11[%c0_69, %c0_70], %232 {strides = array<i32>} : memref<32x8xf32, #tpu.memory_space<vmem>>, vector<32x8xf32>,
    } else {
    }
    %c0 = arith.constant 0 : index
    %c0_1 = arith.constant 0 : index
    %3 = vector.load %arg4[%c0, %c0_1] : memref<128x32xbf16, #tpu.memory_space<vmem>>, vector<128x32xbf16>
    %c0_2 = arith.constant 0 : index
    %c0_3 = arith.constant 0 : index
    %4 = vector.load %arg5[%c0_2, %c0_3] : memref<32x32xbf16, #tpu.memory_space<vmem>>, vector<32x32xbf16>
    %c0_4 = arith.constant 0 : index
    %c0_5 = arith.constant 0 : index
    %5 = vector.load %arg6[%c0_4, %c0_5] : memref<32x1xf32, #tpu.memory_space<vmem>>, vector<32x1xf32>
    %c0_6 = arith.constant 0 : index
    %c0_7 = arith.constant 0 : index
    %6 = vector.load %arg7[%c0_6, %c0_7] : memref<1x32xbf16, #tpu.memory_space<vmem>>, vector<1x32xbf16>
    %c0_8 = arith.constant 0 : index
    %c0_9 = arith.constant 0 : index
    %7 = vector.load %arg8[%c0_8, %c0_9] : memref<1x1xf32, #tpu.memory_space<vmem>>, vector<1x1xf32>
    %c0_10 = arith.constant 0 : index
    %c0_11 = arith.constant 0 : index
    %8 = vector.load %arg2[%c0_10, %c0_11] : memref<1x8xi32, #tpu.memory_space<vmem>>, vector<1x8xi32>
    %c4_i32 = arith.constant 4 : i32
    %9 = arith.muli %arg1, %c4_i32 : i32
    %c0_12 = arith.constant 0 : index
    %c0_13 = arith.constant 0 : index
    %10 = vector.load %arg10[%c0_12, %c0_13] : memref<32x8xf32, #tpu.memory_space<vmem>>, vector<32x8xf32>
    %c0_14 = arith.constant 0 : index
    %c0_15 = arith.constant 0 : index
    %11 = vector.load %arg11[%c0_14, %c0_15] : memref<32x8xf32, #tpu.memory_space<vmem>>, vector<32x8xf32>
    %c0_i32_16 = arith.constant 0 : i32
    %12 = arith.index_cast %c0_i32_16 : i32 to index
    %c0_17 = arith.constant 0 : index
    %c0_18 = arith.constant 0 : index
    %13 = vector.load %arg3[%12, %c0_17, %c0_18] : memref<4x128x8xf32, #tpu.memory_space<vmem>>, vector<1x128x8xf32>
    %14 = vector.shape_cast %13 : vector<1x128x8xf32> to vector<128x8xf32>
    %15 = arith.truncf %10 : vector<32x8xf32> to vector<32x8xbf16>
    %cst = arith.constant dense<0.000000e+00> : vector<128x8xf32>
    %16 = tpu.matmul %3, %15, %cst {dimension_numbers = #tpu.dot_dimension_numbers<[1], [0], [0], [1], [0, 0, 1, 1], [], []>} : vector<128x32xbf16>, vector<32x8xbf16>, vector<128x8xf32> -> vector<128x8xf32>
    %17 = arith.addf %14, %16 : vector<128x8xf32>
    %18 = vector.extract_strided_slice %17 {offsets = [0, 0], sizes = [96, 8], strides = [1, 1]} : vector<128x8xf32> to vector<96x8xf32>
    %19 = arith.negf %18 : vector<96x8xf32>
    %20 = math.exp %19 : vector<96x8xf32>
    %cst_19 = arith.constant 1.000000e+00 : f32
    %21 = vector.broadcast %cst_19 : f32 to vector<96x8xf32>
    %22 = arith.addf %21, %20 : vector<96x8xf32>
    %23 = arith.divf %21, %22 : vector<96x8xf32>
    %24 = vector.extract_strided_slice %23 {offsets = [0, 0], sizes = [32, 8], strides = [1, 1]} : vector<96x8xf32> to vector<32x8xf32>
    %25 = vector.extract_strided_slice %23 {offsets = [32, 0], sizes = [32, 8], strides = [1, 1]} : vector<96x8xf32> to vector<32x8xf32>
    %26 = vector.extract_strided_slice %23 {offsets = [64, 0], sizes = [32, 8], strides = [1, 1]} : vector<96x8xf32> to vector<32x8xf32>
    %27 = vector.extract_strided_slice %17 {offsets = [96, 0], sizes = [32, 8], strides = [1, 1]} : vector<128x8xf32> to vector<32x8xf32>
    %28 = math.tanh %27 : vector<32x8xf32>
    %29 = arith.mulf %25, %11 : vector<32x8xf32>
    %30 = arith.mulf %24, %28 : vector<32x8xf32>
    %31 = arith.addf %29, %30 : vector<32x8xf32>
    %32 = math.tanh %31 : vector<32x8xf32>
    %33 = arith.mulf %26, %32 : vector<32x8xf32>
    %34 = arith.addi %9, %c0_i32_16 : i32
    %35 = vector.broadcast %34 : i32 to vector<1x8xi32>
    %36 = arith.cmpi slt, %35, %8 : vector<1x8xi32>
    %37 = vector.shape_cast %36 : vector<1x8xi1> to vector<1x8xi1>
    %38 = vector.broadcast %37 : vector<1x8xi1> to vector<32x8xi1>
    %39 = arith.select %38, %33, %10 : vector<32x8xi1>, vector<32x8xf32>
    %40 = vector.shape_cast %36 : vector<1x8xi1> to vector<1x8xi1>
    %41 = vector.broadcast %40 : vector<1x8xi1> to vector<32x8xi1>
    %42 = arith.select %41, %31, %11 : vector<32x8xi1>, vector<32x8xf32>
    %cst_20 = arith.constant 0.000000e+00 : f32
    %43 = vector.shape_cast %36 : vector<1x8xi1> to vector<1x8xi1>
    %44 = vector.broadcast %43 : vector<1x8xi1> to vector<32x8xi1>
    %45 = vector.broadcast %cst_20 : f32 to vector<32x8xf32>
    %46 = arith.select %44, %33, %45 : vector<32x8xi1>, vector<32x8xf32>
    %47 = arith.truncf %46 : vector<32x8xf32> to vector<32x8xbf16>
    %cst_21 = arith.constant dense<0.000000e+00> : vector<32x8xf32>
    %48 = tpu.matmul %4, %47, %cst_21 {dimension_numbers = #tpu.dot_dimension_numbers<[1], [0], [0], [1], [0, 0, 1, 1], [], []>} : vector<32x32xbf16>, vector<32x8xbf16>, vector<32x8xf32> -> vector<32x8xf32>
    %49 = vector.broadcast %5 : vector<32x1xf32> to vector<32x8xf32>
    %50 = arith.addf %48, %49 : vector<32x8xf32>
    %cst_22 = arith.constant 0.000000e+00 : f32
    %51 = vector.broadcast %cst_22 : f32 to vector<32x8xf32>
    %52 = arith.maximumf %50, %51 : vector<32x8xf32>
    %53 = arith.truncf %52 : vector<32x8xf32> to vector<32x8xbf16>
    %cst_23 = arith.constant dense<0.000000e+00> : vector<1x8xf32>
    %54 = tpu.matmul %6, %53, %cst_23 {dimension_numbers = #tpu.dot_dimension_numbers<[1], [0], [0], [1], [0, 0, 1, 1], [], []>} : vector<1x32xbf16>, vector<32x8xbf16>, vector<1x8xf32> -> vector<1x8xf32>
    %55 = vector.broadcast %7 : vector<1x1xf32> to vector<1x8xf32>
    %56 = arith.addf %54, %55 : vector<1x8xf32>
    %57 = arith.negf %56 : vector<1x8xf32>
    %58 = math.exp %57 : vector<1x8xf32>
    %cst_24 = arith.constant 1.000000e+00 : f32
    %59 = vector.broadcast %cst_24 : f32 to vector<1x8xf32>
    %60 = arith.addf %59, %58 : vector<1x8xf32>
    %61 = arith.divf %59, %60 : vector<1x8xf32>
    %62 = arith.index_cast %c0_i32_16 : i32 to index
    %c0_25 = arith.constant 0 : index
    %c0_26 = arith.constant 0 : index
    %63 = vector.load %arg9[%62, %c0_25, %c0_26] : memref<4x1x8xf32, #tpu.memory_space<vmem>>, vector<1x1x8xf32>
    %64 = vector.shape_cast %63 : vector<1x1x8xf32> to vector<1x8xf32>
    %65 = vector.shape_cast %61 : vector<1x8xf32> to vector<1x1x8xf32>
    tpu.vector_store %arg9[%62, %c0_25, %c0_26], %65 {strides = array<i32>} : memref<4x1x8xf32, #tpu.memory_space<vmem>>, vector<1x1x8xf32>,
    %c1_i32 = arith.constant 1 : i32
    %66 = arith.index_cast %c1_i32 : i32 to index
    %c0_27 = arith.constant 0 : index
    %c0_28 = arith.constant 0 : index
    %67 = vector.load %arg3[%66, %c0_27, %c0_28] : memref<4x128x8xf32, #tpu.memory_space<vmem>>, vector<1x128x8xf32>
    %68 = vector.shape_cast %67 : vector<1x128x8xf32> to vector<128x8xf32>
    %69 = arith.truncf %39 : vector<32x8xf32> to vector<32x8xbf16>
    %cst_29 = arith.constant dense<0.000000e+00> : vector<128x8xf32>
    %70 = tpu.matmul %3, %69, %cst_29 {dimension_numbers = #tpu.dot_dimension_numbers<[1], [0], [0], [1], [0, 0, 1, 1], [], []>} : vector<128x32xbf16>, vector<32x8xbf16>, vector<128x8xf32> -> vector<128x8xf32>
    %71 = arith.addf %68, %70 : vector<128x8xf32>
    %72 = vector.extract_strided_slice %71 {offsets = [0, 0], sizes = [96, 8], strides = [1, 1]} : vector<128x8xf32> to vector<96x8xf32>
    %73 = arith.negf %72 : vector<96x8xf32>
    %74 = math.exp %73 : vector<96x8xf32>
    %cst_30 = arith.constant 1.000000e+00 : f32
    %75 = vector.broadcast %cst_30 : f32 to vector<96x8xf32>
    %76 = arith.addf %75, %74 : vector<96x8xf32>
    %77 = arith.divf %75, %76 : vector<96x8xf32>
    %78 = vector.extract_strided_slice %77 {offsets = [0, 0], sizes = [32, 8], strides = [1, 1]} : vector<96x8xf32> to vector<32x8xf32>
    %79 = vector.extract_strided_slice %77 {offsets = [32, 0], sizes = [32, 8], strides = [1, 1]} : vector<96x8xf32> to vector<32x8xf32>
    %80 = vector.extract_strided_slice %77 {offsets = [64, 0], sizes = [32, 8], strides = [1, 1]} : vector<96x8xf32> to vector<32x8xf32>
    %81 = vector.extract_strided_slice %71 {offsets = [96, 0], sizes = [32, 8], strides = [1, 1]} : vector<128x8xf32> to vector<32x8xf32>
    %82 = math.tanh %81 : vector<32x8xf32>
    %83 = arith.mulf %79, %42 : vector<32x8xf32>
    %84 = arith.mulf %78, %82 : vector<32x8xf32>
    %85 = arith.addf %83, %84 : vector<32x8xf32>
    %86 = math.tanh %85 : vector<32x8xf32>
    %87 = arith.mulf %80, %86 : vector<32x8xf32>
    %88 = arith.addi %9, %c1_i32 : i32
    %89 = vector.broadcast %88 : i32 to vector<1x8xi32>
    %90 = arith.cmpi slt, %89, %8 : vector<1x8xi32>
    %91 = vector.shape_cast %90 : vector<1x8xi1> to vector<1x8xi1>
    %92 = vector.broadcast %91 : vector<1x8xi1> to vector<32x8xi1>
    %93 = arith.select %92, %87, %39 : vector<32x8xi1>, vector<32x8xf32>
    %94 = vector.shape_cast %90 : vector<1x8xi1> to vector<1x8xi1>
    %95 = vector.broadcast %94 : vector<1x8xi1> to vector<32x8xi1>
    %96 = arith.select %95, %85, %42 : vector<32x8xi1>, vector<32x8xf32>
    %cst_31 = arith.constant 0.000000e+00 : f32
    %97 = vector.shape_cast %90 : vector<1x8xi1> to vector<1x8xi1>
    %98 = vector.broadcast %97 : vector<1x8xi1> to vector<32x8xi1>
    %99 = vector.broadcast %cst_31 : f32 to vector<32x8xf32>
    %100 = arith.select %98, %87, %99 : vector<32x8xi1>, vector<32x8xf32>
    %101 = arith.truncf %100 : vector<32x8xf32> to vector<32x8xbf16>
    %cst_32 = arith.constant dense<0.000000e+00> : vector<32x8xf32>
    %102 = tpu.matmul %4, %101, %cst_32 {dimension_numbers = #tpu.dot_dimension_numbers<[1], [0], [0], [1], [0, 0, 1, 1], [], []>} : vector<32x32xbf16>, vector<32x8xbf16>, vector<32x8xf32> -> vector<32x8xf32>
    %103 = vector.broadcast %5 : vector<32x1xf32> to vector<32x8xf32>
    %104 = arith.addf %102, %103 : vector<32x8xf32>
    %cst_33 = arith.constant 0.000000e+00 : f32
    %105 = vector.broadcast %cst_33 : f32 to vector<32x8xf32>
    %106 = arith.maximumf %104, %105 : vector<32x8xf32>
    %107 = arith.truncf %106 : vector<32x8xf32> to vector<32x8xbf16>
    %cst_34 = arith.constant dense<0.000000e+00> : vector<1x8xf32>
    %108 = tpu.matmul %6, %107, %cst_34 {dimension_numbers = #tpu.dot_dimension_numbers<[1], [0], [0], [1], [0, 0, 1, 1], [], []>} : vector<1x32xbf16>, vector<32x8xbf16>, vector<1x8xf32> -> vector<1x8xf32>
    %109 = vector.broadcast %7 : vector<1x1xf32> to vector<1x8xf32>
    %110 = arith.addf %108, %109 : vector<1x8xf32>
    %111 = arith.negf %110 : vector<1x8xf32>
    %112 = math.exp %111 : vector<1x8xf32>
    %cst_35 = arith.constant 1.000000e+00 : f32
    %113 = vector.broadcast %cst_35 : f32 to vector<1x8xf32>
    %114 = arith.addf %113, %112 : vector<1x8xf32>
    %115 = arith.divf %113, %114 : vector<1x8xf32>
    %116 = arith.index_cast %c1_i32 : i32 to index
    %c0_36 = arith.constant 0 : index
    %c0_37 = arith.constant 0 : index
    %117 = vector.load %arg9[%116, %c0_36, %c0_37] : memref<4x1x8xf32, #tpu.memory_space<vmem>>, vector<1x1x8xf32>
    %118 = vector.shape_cast %117 : vector<1x1x8xf32> to vector<1x8xf32>
    %119 = vector.shape_cast %115 : vector<1x8xf32> to vector<1x1x8xf32>
    tpu.vector_store %arg9[%116, %c0_36, %c0_37], %119 {strides = array<i32>} : memref<4x1x8xf32, #tpu.memory_space<vmem>>, vector<1x1x8xf32>,
    %c2_i32 = arith.constant 2 : i32
    %120 = arith.index_cast %c2_i32 : i32 to index
    %c0_38 = arith.constant 0 : index
    %c0_39 = arith.constant 0 : index
    %121 = vector.load %arg3[%120, %c0_38, %c0_39] : memref<4x128x8xf32, #tpu.memory_space<vmem>>, vector<1x128x8xf32>
    %122 = vector.shape_cast %121 : vector<1x128x8xf32> to vector<128x8xf32>
    %123 = arith.truncf %93 : vector<32x8xf32> to vector<32x8xbf16>
    %cst_40 = arith.constant dense<0.000000e+00> : vector<128x8xf32>
    %124 = tpu.matmul %3, %123, %cst_40 {dimension_numbers = #tpu.dot_dimension_numbers<[1], [0], [0], [1], [0, 0, 1, 1], [], []>} : vector<128x32xbf16>, vector<32x8xbf16>, vector<128x8xf32> -> vector<128x8xf32>
    %125 = arith.addf %122, %124 : vector<128x8xf32>
    %126 = vector.extract_strided_slice %125 {offsets = [0, 0], sizes = [96, 8], strides = [1, 1]} : vector<128x8xf32> to vector<96x8xf32>
    %127 = arith.negf %126 : vector<96x8xf32>
    %128 = math.exp %127 : vector<96x8xf32>
    %cst_41 = arith.constant 1.000000e+00 : f32
    %129 = vector.broadcast %cst_41 : f32 to vector<96x8xf32>
    %130 = arith.addf %129, %128 : vector<96x8xf32>
    %131 = arith.divf %129, %130 : vector<96x8xf32>
    %132 = vector.extract_strided_slice %131 {offsets = [0, 0], sizes = [32, 8], strides = [1, 1]} : vector<96x8xf32> to vector<32x8xf32>
    %133 = vector.extract_strided_slice %131 {offsets = [32, 0], sizes = [32, 8], strides = [1, 1]} : vector<96x8xf32> to vector<32x8xf32>
    %134 = vector.extract_strided_slice %131 {offsets = [64, 0], sizes = [32, 8], strides = [1, 1]} : vector<96x8xf32> to vector<32x8xf32>
    %135 = vector.extract_strided_slice %125 {offsets = [96, 0], sizes = [32, 8], strides = [1, 1]} : vector<128x8xf32> to vector<32x8xf32>
    %136 = math.tanh %135 : vector<32x8xf32>
    %137 = arith.mulf %133, %96 : vector<32x8xf32>
    %138 = arith.mulf %132, %136 : vector<32x8xf32>
    %139 = arith.addf %137, %138 : vector<32x8xf32>
    %140 = math.tanh %139 : vector<32x8xf32>
    %141 = arith.mulf %134, %140 : vector<32x8xf32>
    %142 = arith.addi %9, %c2_i32 : i32
    %143 = vector.broadcast %142 : i32 to vector<1x8xi32>
    %144 = arith.cmpi slt, %143, %8 : vector<1x8xi32>
    %145 = vector.shape_cast %144 : vector<1x8xi1> to vector<1x8xi1>
    %146 = vector.broadcast %145 : vector<1x8xi1> to vector<32x8xi1>
    %147 = arith.select %146, %141, %93 : vector<32x8xi1>, vector<32x8xf32>
    %148 = vector.shape_cast %144 : vector<1x8xi1> to vector<1x8xi1>
    %149 = vector.broadcast %148 : vector<1x8xi1> to vector<32x8xi1>
    %150 = arith.select %149, %139, %96 : vector<32x8xi1>, vector<32x8xf32>
    %cst_42 = arith.constant 0.000000e+00 : f32
    %151 = vector.shape_cast %144 : vector<1x8xi1> to vector<1x8xi1>
    %152 = vector.broadcast %151 : vector<1x8xi1> to vector<32x8xi1>
    %153 = vector.broadcast %cst_42 : f32 to vector<32x8xf32>
    %154 = arith.select %152, %141, %153 : vector<32x8xi1>, vector<32x8xf32>
    %155 = arith.truncf %154 : vector<32x8xf32> to vector<32x8xbf16>
    %cst_43 = arith.constant dense<0.000000e+00> : vector<32x8xf32>
    %156 = tpu.matmul %4, %155, %cst_43 {dimension_numbers = #tpu.dot_dimension_numbers<[1], [0], [0], [1], [0, 0, 1, 1], [], []>} : vector<32x32xbf16>, vector<32x8xbf16>, vector<32x8xf32> -> vector<32x8xf32>
    %157 = vector.broadcast %5 : vector<32x1xf32> to vector<32x8xf32>
    %158 = arith.addf %156, %157 : vector<32x8xf32>
    %cst_44 = arith.constant 0.000000e+00 : f32
    %159 = vector.broadcast %cst_44 : f32 to vector<32x8xf32>
    %160 = arith.maximumf %158, %159 : vector<32x8xf32>
    %161 = arith.truncf %160 : vector<32x8xf32> to vector<32x8xbf16>
    %cst_45 = arith.constant dense<0.000000e+00> : vector<1x8xf32>
    %162 = tpu.matmul %6, %161, %cst_45 {dimension_numbers = #tpu.dot_dimension_numbers<[1], [0], [0], [1], [0, 0, 1, 1], [], []>} : vector<1x32xbf16>, vector<32x8xbf16>, vector<1x8xf32> -> vector<1x8xf32>
    %163 = vector.broadcast %7 : vector<1x1xf32> to vector<1x8xf32>
    %164 = arith.addf %162, %163 : vector<1x8xf32>
    %165 = arith.negf %164 : vector<1x8xf32>
    %166 = math.exp %165 : vector<1x8xf32>
    %cst_46 = arith.constant 1.000000e+00 : f32
    %167 = vector.broadcast %cst_46 : f32 to vector<1x8xf32>
    %168 = arith.addf %167, %166 : vector<1x8xf32>
    %169 = arith.divf %167, %168 : vector<1x8xf32>
    %170 = arith.index_cast %c2_i32 : i32 to index
    %c0_47 = arith.constant 0 : index
    %c0_48 = arith.constant 0 : index
    %171 = vector.load %arg9[%170, %c0_47, %c0_48] : memref<4x1x8xf32, #tpu.memory_space<vmem>>, vector<1x1x8xf32>
    %172 = vector.shape_cast %171 : vector<1x1x8xf32> to vector<1x8xf32>
    %173 = vector.shape_cast %169 : vector<1x8xf32> to vector<1x1x8xf32>
    tpu.vector_store %arg9[%170, %c0_47, %c0_48], %173 {strides = array<i32>} : memref<4x1x8xf32, #tpu.memory_space<vmem>>, vector<1x1x8xf32>,
    %c3_i32 = arith.constant 3 : i32
    %174 = arith.index_cast %c3_i32 : i32 to index
    %c0_49 = arith.constant 0 : index
    %c0_50 = arith.constant 0 : index
    %175 = vector.load %arg3[%174, %c0_49, %c0_50] : memref<4x128x8xf32, #tpu.memory_space<vmem>>, vector<1x128x8xf32>
    %176 = vector.shape_cast %175 : vector<1x128x8xf32> to vector<128x8xf32>
    %177 = arith.truncf %147 : vector<32x8xf32> to vector<32x8xbf16>
    %cst_51 = arith.constant dense<0.000000e+00> : vector<128x8xf32>
    %178 = tpu.matmul %3, %177, %cst_51 {dimension_numbers = #tpu.dot_dimension_numbers<[1], [0], [0], [1], [0, 0, 1, 1], [], []>} : vector<128x32xbf16>, vector<32x8xbf16>, vector<128x8xf32> -> vector<128x8xf32>
    %179 = arith.addf %176, %178 : vector<128x8xf32>
    %180 = vector.extract_strided_slice %179 {offsets = [0, 0], sizes = [96, 8], strides = [1, 1]} : vector<128x8xf32> to vector<96x8xf32>
    %181 = arith.negf %180 : vector<96x8xf32>
    %182 = math.exp %181 : vector<96x8xf32>
    %cst_52 = arith.constant 1.000000e+00 : f32
    %183 = vector.broadcast %cst_52 : f32 to vector<96x8xf32>
    %184 = arith.addf %183, %182 : vector<96x8xf32>
    %185 = arith.divf %183, %184 : vector<96x8xf32>
    %186 = vector.extract_strided_slice %185 {offsets = [0, 0], sizes = [32, 8], strides = [1, 1]} : vector<96x8xf32> to vector<32x8xf32>
    %187 = vector.extract_strided_slice %185 {offsets = [32, 0], sizes = [32, 8], strides = [1, 1]} : vector<96x8xf32> to vector<32x8xf32>
    %188 = vector.extract_strided_slice %185 {offsets = [64, 0], sizes = [32, 8], strides = [1, 1]} : vector<96x8xf32> to vector<32x8xf32>
    %189 = vector.extract_strided_slice %179 {offsets = [96, 0], sizes = [32, 8], strides = [1, 1]} : vector<128x8xf32> to vector<32x8xf32>
    %190 = math.tanh %189 : vector<32x8xf32>
    %191 = arith.mulf %187, %150 : vector<32x8xf32>
    %192 = arith.mulf %186, %190 : vector<32x8xf32>
    %193 = arith.addf %191, %192 : vector<32x8xf32>
    %194 = math.tanh %193 : vector<32x8xf32>
    %195 = arith.mulf %188, %194 : vector<32x8xf32>
    %196 = arith.addi %9, %c3_i32 : i32
    %197 = vector.broadcast %196 : i32 to vector<1x8xi32>
    %198 = arith.cmpi slt, %197, %8 : vector<1x8xi32>
    %199 = vector.shape_cast %198 : vector<1x8xi1> to vector<1x8xi1>
    %200 = vector.broadcast %199 : vector<1x8xi1> to vector<32x8xi1>
    %201 = arith.select %200, %195, %147 : vector<32x8xi1>, vector<32x8xf32>
    %202 = vector.shape_cast %198 : vector<1x8xi1> to vector<1x8xi1>
    %203 = vector.broadcast %202 : vector<1x8xi1> to vector<32x8xi1>
    %204 = arith.select %203, %193, %150 : vector<32x8xi1>, vector<32x8xf32>
    %cst_53 = arith.constant 0.000000e+00 : f32
    %205 = vector.shape_cast %198 : vector<1x8xi1> to vector<1x8xi1>
    %206 = vector.broadcast %205 : vector<1x8xi1> to vector<32x8xi1>
    %207 = vector.broadcast %cst_53 : f32 to vector<32x8xf32>
    %208 = arith.select %206, %195, %207 : vector<32x8xi1>, vector<32x8xf32>
    %209 = arith.truncf %208 : vector<32x8xf32> to vector<32x8xbf16>
    %cst_54 = arith.constant dense<0.000000e+00> : vector<32x8xf32>
    %210 = tpu.matmul %4, %209, %cst_54 {dimension_numbers = #tpu.dot_dimension_numbers<[1], [0], [0], [1], [0, 0, 1, 1], [], []>} : vector<32x32xbf16>, vector<32x8xbf16>, vector<32x8xf32> -> vector<32x8xf32>
    %211 = vector.broadcast %5 : vector<32x1xf32> to vector<32x8xf32>
    %212 = arith.addf %210, %211 : vector<32x8xf32>
    %cst_55 = arith.constant 0.000000e+00 : f32
    %213 = vector.broadcast %cst_55 : f32 to vector<32x8xf32>
    %214 = arith.maximumf %212, %213 : vector<32x8xf32>
    %215 = arith.truncf %214 : vector<32x8xf32> to vector<32x8xbf16>
    %cst_56 = arith.constant dense<0.000000e+00> : vector<1x8xf32>
    %216 = tpu.matmul %6, %215, %cst_56 {dimension_numbers = #tpu.dot_dimension_numbers<[1], [0], [0], [1], [0, 0, 1, 1], [], []>} : vector<1x32xbf16>, vector<32x8xbf16>, vector<1x8xf32> -> vector<1x8xf32>
    %217 = vector.broadcast %7 : vector<1x1xf32> to vector<1x8xf32>
    %218 = arith.addf %216, %217 : vector<1x8xf32>
    %219 = arith.negf %218 : vector<1x8xf32>
    %220 = math.exp %219 : vector<1x8xf32>
    %cst_57 = arith.constant 1.000000e+00 : f32
    %221 = vector.broadcast %cst_57 : f32 to vector<1x8xf32>
    %222 = arith.addf %221, %220 : vector<1x8xf32>
    %223 = arith.divf %221, %222 : vector<1x8xf32>
    %224 = arith.index_cast %c3_i32 : i32 to index
    %c0_58 = arith.constant 0 : index
    %c0_59 = arith.constant 0 : index
    %225 = vector.load %arg9[%224, %c0_58, %c0_59] : memref<4x1x8xf32, #tpu.memory_space<vmem>>, vector<1x1x8xf32>
    %226 = vector.shape_cast %225 : vector<1x1x8xf32> to vector<1x8xf32>
    %227 = vector.shape_cast %223 : vector<1x8xf32> to vector<1x1x8xf32>
    tpu.vector_store %arg9[%224, %c0_58, %c0_59], %227 {strides = array<i32>} : memref<4x1x8xf32, #tpu.memory_space<vmem>>, vector<1x1x8xf32>,
    %c4_i32_60 = arith.constant 4 : i32
    %c0_61 = arith.constant 0 : index
    %c0_62 = arith.constant 0 : index
    %228 = vector.load %arg10[%c0_61, %c0_62] : memref<32x8xf32, #tpu.memory_space<vmem>>, vector<32x8xf32>
    tpu.vector_store %arg10[%c0_61, %c0_62], %201 {strides = array<i32>} : memref<32x8xf32, #tpu.memory_space<vmem>>, vector<32x8xf32>,
    %c0_63 = arith.constant 0 : index
    %c0_64 = arith.constant 0 : index
    %229 = vector.load %arg11[%c0_63, %c0_64] : memref<32x8xf32, #tpu.memory_space<vmem>>, vector<32x8xf32>
    tpu.vector_store %arg11[%c0_63, %c0_64], %204 {strides = array<i32>} : memref<32x8xf32, #tpu.memory_space<vmem>>, vector<32x8xf32>,
    return
  }
  func.func @transform_0(%arg0: i32, %arg1: i32) -> (i32, i32) {
    %c0_i32 = arith.constant 0 : i32
    %c0_i32_0 = arith.constant 0 : i32
    return %c0_i32, %arg0 : i32, i32
  }
  func.func @transform_1(%arg0: i32, %arg1: i32) -> (i32, i32, i32) {
    %c0_i32 = arith.constant 0 : i32
    %c0_i32_0 = arith.constant 0 : i32
    return %arg1, %c0_i32, %arg0 : i32, i32, i32
  }
  func.func @transform_2(%arg0: i32, %arg1: i32) -> (i32, i32) {
    %c0_i32 = arith.constant 0 : i32
    %c0_i32_0 = arith.constant 0 : i32
    %c0_i32_1 = arith.constant 0 : i32
    return %c0_i32, %c0_i32_0 : i32, i32
  }
  func.func @transform_3(%arg0: i32, %arg1: i32) -> (i32, i32) {
    %c0_i32 = arith.constant 0 : i32
    %c0_i32_0 = arith.constant 0 : i32
    %c0_i32_1 = arith.constant 0 : i32
    return %c0_i32, %c0_i32_0 : i32, i32
  }
  func.func @transform_4(%arg0: i32, %arg1: i32) -> (i32, i32) {
    %c0_i32 = arith.constant 0 : i32
    %c0_i32_0 = arith.constant 0 : i32
    %c0_i32_1 = arith.constant 0 : i32
    return %c0_i32, %c0_i32_0 : i32, i32
  }
  func.func @transform_5(%arg0: i32, %arg1: i32) -> (i32, i32) {
    %c0_i32 = arith.constant 0 : i32
    %c0_i32_0 = arith.constant 0 : i32
    %c0_i32_1 = arith.constant 0 : i32
    return %c0_i32, %c0_i32_0 : i32, i32
  }
  func.func @transform_6(%arg0: i32, %arg1: i32) -> (i32, i32) {
    %c0_i32 = arith.constant 0 : i32
    %c0_i32_0 = arith.constant 0 : i32
    %c0_i32_1 = arith.constant 0 : i32
    return %c0_i32, %c0_i32_0 : i32, i32
  }
  func.func @transform_7(%arg0: i32, %arg1: i32) -> (i32, i32, i32) {
    %c0_i32 = arith.constant 0 : i32
    %c0_i32_0 = arith.constant 0 : i32
    return %arg1, %c0_i32, %arg0 : i32, i32, i32
  }
}

</mosaic_0001>

<llo_original>
// kernel: tpu_custom_call.1
$region0: #{tpu_custom_call.1}
  #allocation0 [shape = 'u32[]', space=smem, size = 0x4, offset = 0x4, fixed_abs, tag = 'smem constant byte address 0x4 - core index']
  #allocation1 [shape = 'u32[72,128]{1,0:T(1,128)}', space=vmem, size = 0x9000, scoped, tag = 'internal scratch']
  #allocation2 [shape = 'f32[32,8]{1,0:T(8,128)}', space=vmem, size = 0x4000, scoped, tag = 'scratch operand']
  #allocation3 [shape = 'f32[32,8]{1,0:T(8,128)}', space=vmem, size = 0x4000, scoped, tag = 'scratch operand']
  #allocation4 [shape = 'f32[1,1]{1,0:T(1,128)S(1)}', space=vmem, size = 0x200, scoped, tag = 'scoped memory for tpu_custom_call.1']
  %s0 = inlined_call_operand.vmem [shape: s32[1,8], index: 0, kind: input, shape index: {}]
  %s1 = inlined_call_operand.vmem [shape: f32[8,128,8], index: 1, kind: input, shape index: {}]
  %s2 = inlined_call_operand.vmem [shape: bf16[128,32], index: 2, kind: input, shape index: {}]
  %s3 = inlined_call_operand.vmem [shape: bf16[32,32], index: 3, kind: input, shape index: {}]
  %s4 = inlined_call_operand.vmem [shape: f32[32,1], index: 4, kind: input, shape index: {}]
  %s5 = inlined_call_operand.vmem [shape: bf16[1,32], index: 5, kind: input, shape index: {}]
  %s6 = inlined_call_operand.<no memory space> [shape: f32[1,1], index: 6, kind: input, shape index: {}]
  %s7 = inlined_call_operand.hbm [shape: f32[8,1,8], index: 7, kind: output, shape index: {}]
  %s8 = sld [smem:[#allocation0]]
  $region65: #{tpu_custom_call.1} parent=0
    _
  %s10 = ssub.s32 1, %s8
  %s11 = scalar_select 0, %s10, %s8
  %v12 = vstv %s6
  %13 = vst [vmem:[#allocation4] sm:$0x1] %v12
  $region1: #{tpu_custom_call.1} parent=0
    #allocation5 [shape = 'u8[4096]{0}', space=vmem, size = 0x1000, scoped, tag = 'output window, operand 0']
    #allocation6 [shape = 's32[2]{0}', space=sflag, size = 0x8, scoped, tag = 'scoped memory for tpu_custom_call.1']
    %14 = vsyncpa [#allocation6], 0
    %s15 = scalar_lea.sflag [#allocation6], 1
    %16 = vsyncpa %s15, 0
    loop: start=0, step=1, limit=4
    $region2: #{tpu_custom_call.1} parent=1 // loop_pre_header
      _
    $region3: #{tpu_custom_call.1} parent=1 // loop_header
      %s18 = sphi 0, %s22
      %p19 = scmp.ge.s32.totalorder %s18, 4
      %s25 = sphi 0, %s37
      %s26 = sphi 0, %s33
      %s27 = sphi 0, %s25
      %s28 = sphi 0, %s26
      %s29 = sphi 0, %s27
      %s30 = sphi 0, %s28
      %s40 = sphi 0, %s42
      %s43 = sphi 0, %s40
      %s44 = sphi 0, %s43
      %s60 = sphi 0, %s44
      %s68 = sphi 0, %s70
      %s71 = sphi 0, %s68
      %s72 = sphi 0, %s71
      %s88 = sphi 0, %s72
      %s92 = sphi 0, %s92
      %s94 = sphi 0, %s92
      %s95 = sphi 0, %s94
      %s109 = sphi 0, %s95
      %s113 = sphi 0, %s113
      %s115 = sphi 0, %s113
      %s116 = sphi 0, %s115
      %s130 = sphi 0, %s116
      %s134 = sphi 0, %s134
      %s136 = sphi 0, %s134
      %s137 = sphi 0, %s136
      %s151 = sphi 0, %s137
      %s155 = sphi 0, %s155
      %s157 = sphi 0, %s155
      %s158 = sphi 0, %s157
      %s172 = sphi 0, %s158
      %s176 = sphi 0, %s176
      %s178 = sphi 0, %s176
      %s179 = sphi 0, %s178
      %s193 = sphi 0, %s179
      %s201 = sphi 0, %s203
      %s204 = sphi 0, %s201
      %s205 = sphi 0, %s204
      %s221 = sphi 0, %s205
    $region4: #{tpu_custom_call.1} parent=1 // loop_header_branch
      %21 = sbr.rel (%p19) target = $region8
    $region5: #{tpu_custom_call.1} parent=1 // loop_body
      %s23 = ssub.s32 %s18, 1
      %s24 = ssub.s32 %s18, 2
      %s31 = sadd.s32 1, %s26
      %p32 = scmp.ge.s32.totalorder %s31, 2
      %s33 = scalar_select %p32, 0, %s31
      %s34 = sadd.s32 1, %s25
      %s35 = scalar_select %p32, %s34, %s25
      %p36 = scmp.ge.s32.totalorder %s35, 1
      %s37 = scalar_select %p36, 0, %s35
      %s38 = ssub.s32 %s25, %s37
      %p39 = scmp.eq.s32.totalorder %s38, 0
      %s41 = sadd.s32 %s40, 1
      %s42 = scalar_select %p39, %s40, %s41
      %p45 = pneg %p39
      %p46 = scmp.eq.s32.totalorder %s18, 1
      %p47 = por %p45, %p46
      %p48 = scmp.ne.s32.totalorder %s40, %s43
      %p49 = scmp.eq.s32.totalorder %s18, 0
      %p50 = por %p48, %p49
      %p51 = scmp.ne.s32.totalorder %s40, %s43
      %p52 = scmp.eq.s32.totalorder %s23, 1
      %p53 = por %p51, %p52
      %p54 = scmp.ne.s32.totalorder %s43, %s44
      %p55 = scmp.eq.s32.totalorder %s23, 0
      %p56 = por %p54, %p55
      %p57 = scmp.ne.s32.totalorder %s43, %s44
      %p58 = scmp.eq.s32.totalorder %s24, 1
      %p59 = por %p57, %p58
      %p61 = scmp.ne.s32.totalorder %s44, %s60
      %p62 = scmp.eq.s32.totalorder %s24, 0
      %p63 = por %p61, %p62
      %s64 = ssub.s32 %s26, %s33
      %s65 = ssub.s32 %s25, %s37
      %s66 = sor.u32 %s64, %s65
      %p67 = scmp.eq.s32.totalorder %s66, 0
      %s69 = sadd.s32 %s68, 1
      %s70 = scalar_select %p67, %s68, %s69
      %p73 = pneg %p67
      %p74 = scmp.eq.s32.totalorder %s18, 1
      %p75 = por %p73, %p74
      %p76 = scmp.ne.s32.totalorder %s68, %s71
      %p77 = scmp.eq.s32.totalorder %s18, 0
      %p78 = por %p76, %p77
      %p79 = scmp.ne.s32.totalorder %s68, %s71
      %p80 = scmp.eq.s32.totalorder %s23, 1
      %p81 = por %p79, %p80
      %p82 = scmp.ne.s32.totalorder %s71, %s72
      %p83 = scmp.eq.s32.totalorder %s23, 0
      %p84 = por %p82, %p83
      %p85 = scmp.ne.s32.totalorder %s71, %s72
      %p86 = scmp.eq.s32.totalorder %s24, 1
      %p87 = por %p85, %p86
      %p89 = scmp.ne.s32.totalorder %s72, %s88
      %p90 = scmp.eq.s32.totalorder %s24, 0
      %p91 = por %p89, %p90
      %s93 = sadd.s32 %s92, 1
      %p96 = scmp.eq.s32.totalorder %s18, 1
      %p97 = scmp.ne.s32.totalorder %s92, %s94
      %p98 = scmp.eq.s32.totalorder %s18, 0
      %p99 = por %p97, %p98
      %p100 = scmp.ne.s32.totalorder %s92, %s94
      %p101 = scmp.eq.s32.totalorder %s23, 1
      %p102 = por %p100, %p101
      %p103 = scmp.ne.s32.totalorder %s94, %s95
      %p104 = scmp.eq.s32.totalorder %s23, 0
      %p105 = por %p103, %p104
      %p106 = scmp.ne.s32.totalorder %s94, %s95
      %p107 = scmp.eq.s32.totalorder %s24, 1
      %p108 = por %p106, %p107
      %p110 = scmp.ne.s32.totalorder %s95, %s109
      %p111 = scmp.eq.s32.totalorder %s24, 0
      %p112 = por %p110, %p111
      %s114 = sadd.s32 %s113, 1
      %p117 = scmp.eq.s32.totalorder %s18, 1
      %p118 = scmp.ne.s32.totalorder %s113, %s115
      %p119 = scmp.eq.s32.totalorder %s18, 0
      %p120 = por %p118, %p119
      %p121 = scmp.ne.s32.totalorder %s113, %s115
      %p122 = scmp.eq.s32.totalorder %s23, 1
      %p123 = por %p121, %p122
      %p124 = scmp.ne.s32.totalorder %s115, %s116
      %p125 = scmp.eq.s32.totalorder %s23, 0
      %p126 = por %p124, %p125
      %p127 = scmp.ne.s32.totalorder %s115, %s116
      %p128 = scmp.eq.s32.totalorder %s24, 1
      %p129 = por %p127, %p128
      %p131 = scmp.ne.s32.totalorder %s116, %s130
      %p132 = scmp.eq.s32.totalorder %s24, 0
      %p133 = por %p131, %p132
      %s135 = sadd.s32 %s134, 1
      %p138 = scmp.eq.s32.totalorder %s18, 1
      %p139 = scmp.ne.s32.totalorder %s134, %s136
      %p140 = scmp.eq.s32.totalorder %s18, 0
      %p141 = por %p139, %p140
      %p142 = scmp.ne.s32.totalorder %s134, %s136
      %p143 = scmp.eq.s32.totalorder %s23, 1
      %p144 = por %p142, %p143
      %p145 = scmp.ne.s32.totalorder %s136, %s137
      %p146 = scmp.eq.s32.totalorder %s23, 0
      %p147 = por %p145, %p146
      %p148 = scmp.ne.s32.totalorder %s136, %s137
      %p149 = scmp.eq.s32.totalorder %s24, 1
      %p150 = por %p148, %p149
      %p152 = scmp.ne.s32.totalorder %s137, %s151
      %p153 = scmp.eq.s32.totalorder %s24, 0
      %p154 = por %p152, %p153
      %s156 = sadd.s32 %s155, 1
      %p159 = scmp.eq.s32.totalorder %s18, 1
      %p160 = scmp.ne.s32.totalorder %s155, %s157
      %p161 = scmp.eq.s32.totalorder %s18, 0
      %p162 = por %p160, %p161
      %p163 = scmp.ne.s32.totalorder %s155, %s157
      %p164 = scmp.eq.s32.totalorder %s23, 1
      %p165 = por %p163, %p164
      %p166 = scmp.ne.s32.totalorder %s157, %s158
      %p167 = scmp.eq.s32.totalorder %s23, 0
      %p168 = por %p166, %p167
      %p169 = scmp.ne.s32.totalorder %s157, %s158
      %p170 = scmp.eq.s32.totalorder %s24, 1
      %p171 = por %p169, %p170
      %p173 = scmp.ne.s32.totalorder %s158, %s172
      %p174 = scmp.eq.s32.totalorder %s24, 0
      %p175 = por %p173, %p174
      %s177 = sadd.s32 %s176, 1
      %p180 = scmp.eq.s32.totalorder %s18, 1
      %p181 = scmp.ne.s32.totalorder %s176, %s178
      %p182 = scmp.eq.s32.totalorder %s18, 0
      %p183 = por %p181, %p182
      %p184 = scmp.ne.s32.totalorder %s176, %s178
      %p185 = scmp.eq.s32.totalorder %s23, 1
      %p186 = por %p184, %p185
      %p187 = scmp.ne.s32.totalorder %s178, %s179
      %p188 = scmp.eq.s32.totalorder %s23, 0
      %p189 = por %p187, %p188
      %p190 = scmp.ne.s32.totalorder %s178, %s179
      %p191 = scmp.eq.s32.totalorder %s24, 1
      %p192 = por %p190, %p191
      %p194 = scmp.ne.s32.totalorder %s179, %s193
      %p195 = scmp.eq.s32.totalorder %s24, 0
      %p196 = por %p194, %p195
      %s197 = ssub.s32 %s26, %s33
      %s198 = ssub.s32 %s25, %s37
      %s199 = sor.u32 %s197, %s198
      %p200 = scmp.eq.s32.totalorder %s199, 0
      %s202 = sadd.s32 %s201, 1
      %s203 = scalar_select %p200, %s201, %s202
      %p206 = pneg %p200
      %p207 = scmp.eq.s32.totalorder %s18, 1
      %p208 = por %p206, %p207
      %p209 = scmp.ne.s32.totalorder %s201, %s204
      %p210 = scmp.eq.s32.totalorder %s18, 0
      %p211 = por %p209, %p210
      %p212 = scmp.ne.s32.totalorder %s201, %s204
      %p213 = scmp.eq.s32.totalorder %s23, 1
      %p214 = por %p212, %p213
      %p215 = scmp.ne.s32.totalorder %s204, %s205
      %p216 = scmp.eq.s32.totalorder %s23, 0
      %p217 = por %p215, %p216
      %p218 = scmp.ne.s32.totalorder %s204, %s205
      %p219 = scmp.eq.s32.totalorder %s24, 1
      %p220 = por %p218, %p219
      %p222 = scmp.ne.s32.totalorder %s205, %s221
      %p223 = scmp.eq.s32.totalorder %s24, 0
      %p224 = por %p222, %p223
      %p225 = scmp.le.s32.totalorder 1, %s18
      %p226 = scmp.lt.s32.totalorder %s18, 3
      %p227 = pnand %p225, %p226
      %p228 = pneg %p227
      // Predicated region
      $region9: #{tpu_custom_call.1} parent=5 // pred_check
        _
      $region10: #{tpu_custom_call.1} parent=5 // pred_check_branch
        %230 = sbr.rel (%p227) target = $region12
      $region11: #{tpu_custom_call.1} parent=5 // pred_region
        %s231 = ssub.s32 %s18, 1
        // Predicated region
        $region13: #{tpu_custom_call.1} parent=11 // pred_check
          %p232 = pneg %p56
        $region14: #{tpu_custom_call.1} parent=11 // pred_check_branch
          %234 = sbr.rel (%p232) target = $region16
        $region15: #{tpu_custom_call.1} parent=11 // pred_region
          %p235 = scmp.lt.s32.totalorder %s27, 0
          %s236 = scalar_select %p235, %s27, 0
          %s237 = scalar_lea.vmem %s0, %s236
        $region16: #{tpu_custom_call.1} parent=11 // pred_fallthru
          _
        // Predicated region
        $region17: #{tpu_custom_call.1} parent=11 // pred_check
          %p238 = pneg %p105
        $region18: #{tpu_custom_call.1} parent=11 // pred_check_branch
          %240 = sbr.rel (%p238) target = $region20
        $region19: #{tpu_custom_call.1} parent=11 // pred_region
          _
        $region20: #{tpu_custom_call.1} parent=11 // pred_fallthru
          _
        // Predicated region
        $region21: #{tpu_custom_call.1} parent=11 // pred_check
          %p241 = pneg %p126
        $region22: #{tpu_custom_call.1} parent=11 // pred_check_branch
          %243 = sbr.rel (%p241) target = $region24
        $region23: #{tpu_custom_call.1} parent=11 // pred_region
          _
        $region24: #{tpu_custom_call.1} parent=11 // pred_fallthru
          _
        // Predicated region
        $region25: #{tpu_custom_call.1} parent=11 // pred_check
          %p244 = pneg %p147
        $region26: #{tpu_custom_call.1} parent=11 // pred_check_branch
          %246 = sbr.rel (%p244) target = $region28
        $region27: #{tpu_custom_call.1} parent=11 // pred_region
          _
        $region28: #{tpu_custom_call.1} parent=11 // pred_fallthru
          _
        // Predicated region
        $region29: #{tpu_custom_call.1} parent=11 // pred_check
          %p247 = pneg %p168
        $region30: #{tpu_custom_call.1} parent=11 // pred_check_branch
          %249 = sbr.rel (%p247) target = $region32
        $region31: #{tpu_custom_call.1} parent=11 // pred_region
          _
        $region32: #{tpu_custom_call.1} parent=11 // pred_fallthru
          _
        // Predicated region
        $region33: #{tpu_custom_call.1} parent=11 // pred_check
          %p250 = pneg %p189
        $region34: #{tpu_custom_call.1} parent=11 // pred_check_branch
          %252 = sbr.rel (%p250) target = $region36
        $region35: #{tpu_custom_call.1} parent=11 // pred_region
          _
        $region36: #{tpu_custom_call.1} parent=11 // pred_fallthru
          _
      $region12: #{tpu_custom_call.1} parent=5 // pred_fallthru
        _
      %p253 = scmp.lt.s32.totalorder %s18, 2
      // Predicated region
      $region37: #{tpu_custom_call.1} parent=5 // pred_check
        %p254 = pneg %p253
      $region38: #{tpu_custom_call.1} parent=5 // pred_check_branch
        %256 = sbr.rel (%p254) target = $region40
      $region39: #{tpu_custom_call.1} parent=5 // pred_region
        // Predicated region
        $region41: #{tpu_custom_call.1} parent=39 // pred_check
          %p257 = pneg %p78
        $region42: #{tpu_custom_call.1} parent=39 // pred_check_branch
          %259 = sbr.rel (%p257) target = $region44
        $region43: #{tpu_custom_call.1} parent=39 // pred_region
          %s260 = smul.u32 4, %s26
          %p261 = scmp.lt.s32.totalorder %s260, 7
          %s262 = scalar_select %p261, %s260, 7
          %p263 = scmp.lt.s32.totalorder %s25, 0
          %s264 = scalar_select %p263, %s25, 0
          %s265 = smul.addr %s262, 16
          %s266 = sadd.s32 %s264, %s265
          %s267 = smul.addr %s266, 8
          %s268 = scalar_lea.vmem %s1, %s267
          %s269 = smul.u32 4, %s26
        $region44: #{tpu_custom_call.1} parent=39 // pred_fallthru
          _
      $region40: #{tpu_custom_call.1} parent=5 // pred_fallthru
        _
      %p270 = scmp.le.s32.totalorder 1, %s18
      %p271 = scmp.lt.s32.totalorder %s18, 3
      %p272 = pnand %p270, %p271
      %p273 = pneg %p272
      // Predicated region
      $region45: #{tpu_custom_call.1} parent=5 // pred_check
        _
      $region46: #{tpu_custom_call.1} parent=5 // pred_check_branch
        %275 = sbr.rel (%p272) target = $region48
      $region47: #{tpu_custom_call.1} parent=5 // pred_region
        %s276 = ssub.s32 %s18, 1
        %p277 = scmp.lt.s32.totalorder %s27, 0
        %s278 = scalar_select %p277, %s27, 0
        %s279 = scalar_lea.vmem %s0, %s278
        %p280 = pneg %p56
        %p281 = pneg %p53
        %s282 = smul.u32 4, %s28
        %p283 = scmp.lt.s32.totalorder %s282, 7
        %s284 = scalar_select %p283, %s282, 7
        %p285 = scmp.lt.s32.totalorder %s27, 0
        %s286 = scalar_select %p285, %s27, 0
        %s287 = smul.addr %s284, 16
        %s288 = sadd.s32 %s286, %s287
        %s289 = smul.addr %s288, 8
        %s290 = scalar_lea.vmem %s1, %s289
        %p291 = pneg %p84
        %p292 = pneg %p81
        %p293 = pneg %p105
        %p294 = pneg %p102
        %p295 = pneg %p126
        %p296 = pneg %p123
        %p297 = pneg %p147
        %p298 = pneg %p144
        %p299 = pneg %p168
        %p300 = pneg %p165
        %p301 = pneg %p189
        %p302 = pneg %p186
        %p303 = pneg %p217
        %p304 = pneg %p214
        %s305 = sand.u32 %s204, 1
        %s306 = scalar_lea.sflag [#allocation6], %s305
        %s307 = sand.u32 %s204, 1
        %s308 = smul.addr %s307, 4
        %s309 = scalar_lea.vmem [#allocation5], %s308
        %p310 = scmp.lt.s32.totalorder %s27, 0
        %s311 = scalar_select %p310, %s27, 0
        %s312 = scalar_lea.vmem %s0, %s311
        %s313 = smul.u32 4, %s28
        %p314 = scmp.lt.s32.totalorder %s313, 7
        %s315 = scalar_select %p314, %s313, 7
        %p316 = scmp.lt.s32.totalorder %s27, 0
        %s317 = scalar_select %p316, %s27, 0
        %s318 = smul.addr %s315, 16
        %s319 = sadd.s32 %s317, %s318
        %s320 = smul.addr %s319, 8
        %s321 = scalar_lea.vmem %s1, %s320
        %s322 = smul.u32 4, %s28
        %s323 = smul.u32 4, %s28
        %p325 = scmp.eq.s32.totalorder %s28, 0
        // Predicated region
        $region49: #{tpu_custom_call.1} parent=47 // pred_check
          %p326 = pneg %p325
        $region50: #{tpu_custom_call.1} parent=47 // pred_check_branch
          %328 = sbr.rel (%p326) target = $region52
        $region51: #{tpu_custom_call.1} parent=47 // pred_region
          %vm329 = vcmask 64512
          %330 = vst.msk [vmem:[#allocation2] sm:$0xff] %vm329, 0.0
          %331 = vst.msk [vmem:[#allocation2 + $0x8] sm:$0xff] %vm329, 0.0
          %332 = vst.msk [vmem:[#allocation2 + $0x10] sm:$0xff] %vm329, 0.0
          %333 = vst.msk [vmem:[#allocation2 + $0x18] sm:$0xff] %vm329, 0.0
          %334 = vst.msk [vmem:[#allocation3] sm:$0xff] %vm329, 0.0
          %335 = vst.msk [vmem:[#allocation3 + $0x8] sm:$0xff] %vm329, 0.0
          %336 = vst.msk [vmem:[#allocation3 + $0x10] sm:$0xff] %vm329, 0.0
          %337 = vst.msk [vmem:[#allocation3 + $0x18] sm:$0xff] %vm329, 0.0
        $region52: #{tpu_custom_call.1} parent=47 // pred_fallthru
          _
        %v338 = vld [vmem:[%s2] sm:$0xf]
        %v339 = vld [vmem:[%s2 + $0x4] sm:$0xf]
        %v340 = vld [vmem:[%s2 + $0x8] sm:$0xf]
        %v341 = vld [vmem:[%s2 + $0xc] sm:$0xf]
        %v342 = vld [vmem:[%s2 + $0x10] sm:$0xf]
        %v343 = vld [vmem:[%s2 + $0x14] sm:$0xf]
        %v344 = vld [vmem:[%s2 + $0x18] sm:$0xf]
        %v345 = vld [vmem:[%s2 + $0x1c] sm:$0xf]
        %v346 = vld [vmem:[%s2 + $0x20] sm:$0xf]
        %v347 = vld [vmem:[%s2 + $0x24] sm:$0xf]
        %v348 = vld [vmem:[%s2 + $0x28] sm:$0xf]
        %v349 = vld [vmem:[%s2 + $0x2c] sm:$0xf]
        %v350 = vld [vmem:[%s2 + $0x30] sm:$0xf]
        %v351 = vld [vmem:[%s2 + $0x34] sm:$0xf]
        %v352 = vld [vmem:[%s2 + $0x38] sm:$0xf]
        %v353 = vld [vmem:[%s2 + $0x3c] sm:$0xf]
        %v354 = vld [vmem:[%s3] sm:$0xf]
        %v355 = vld [vmem:[%s3 + $0x4] sm:$0xf]
        %v356 = vld [vmem:[%s3 + $0x8] sm:$0xf]
        %v357 = vld [vmem:[%s3 + $0xc] sm:$0xf]
        %v358 = vld [vmem:[%s4] sm:$0xff]
        %v359 = vld [vmem:[%s4 + $0x8] sm:$0xff]
        %v360 = vld [vmem:[%s4 + $0x10] sm:$0xff]
        %v361 = vld [vmem:[%s4 + $0x18] sm:$0xff]
        %v362 = vld [vmem:[%s5] sm:$0x1]
        %v363 = vld [vmem:[#allocation4] sm:$0x1]
        %v364 = vld [vmem:[%s312] sm:$0x1]
        %s365 = smul.u32 %s28, 4
        %v366 = vld [vmem:[#allocation2] sm:$0xff]
        %v367 = vld [vmem:[#allocation2 + $0x8] sm:$0xff]
        %v368 = vld [vmem:[#allocation2 + $0x10] sm:$0xff]
        %v369 = vld [vmem:[#allocation2 + $0x18] sm:$0xff]
        %v370 = vld [vmem:[#allocation3] sm:$0xff]
        %v371 = vld [vmem:[#allocation3 + $0x8] sm:$0xff]
        %v372 = vld [vmem:[#allocation3 + $0x10] sm:$0xff]
        %v373 = vld [vmem:[#allocation3 + $0x18] sm:$0xff]
        %v374 = vld [vmem:[%s321] sm:$0xff]
        %v375 = vld [vmem:[%s321 + $0x8] sm:$0xff]
        %v376 = vld [vmem:[%s321 + $0x10] sm:$0xff]
        %v377 = vld [vmem:[%s321 + $0x18] sm:$0xff]
        %v378 = vld [vmem:[%s321 + $0x20] sm:$0xff]
        %v379 = vld [vmem:[%s321 + $0x28] sm:$0xff]
        %v380 = vld [vmem:[%s321 + $0x30] sm:$0xff]
        %v381 = vld [vmem:[%s321 + $0x38] sm:$0xff]
        %v382 = vld [vmem:[%s321 + $0x40] sm:$0xff]
        %v383 = vld [vmem:[%s321 + $0x48] sm:$0xff]
        %v384 = vld [vmem:[%s321 + $0x50] sm:$0xff]
        %v385 = vld [vmem:[%s321 + $0x58] sm:$0xff]
        %v386 = vld [vmem:[%s321 + $0x60] sm:$0xff]
        %v387 = vld [vmem:[%s321 + $0x68] sm:$0xff]
        %v388 = vld [vmem:[%s321 + $0x70] sm:$0xff]
        %v389 = vld [vmem:[%s321 + $0x78] sm:$0xff]
        %v390 = vpack.c.bf16 %v367, %v366
        %v391 = vpack.c.bf16 %v369, %v368
        %v408 = vunpack.c.l.b16 %v338
        %v409 = vunpack.c.l.b16 %v339
        %v410 = vunpack.c.l.b16 %v340
        %v411 = vunpack.c.l.b16 %v341
        %v412 = vunpack.c.l.b16 %v342
        %v413 = vunpack.c.l.b16 %v343
        %v414 = vunpack.c.l.b16 %v344
        %v415 = vunpack.c.l.b16 %v345
        %v416 = vunpack.c.l.b16 %v346
        %v417 = vunpack.c.l.b16 %v347
        %v418 = vunpack.c.l.b16 %v348
        %v419 = vunpack.c.l.b16 %v349
        %v420 = vunpack.c.l.b16 %v350
        %v421 = vunpack.c.l.b16 %v351
        %v422 = vunpack.c.l.b16 %v352
        %v423 = vunpack.c.l.b16 %v353
        %v424 = vpack.c.b16 %v409, %v408
        %v425 = vpack.c.b16 %v411, %v410
        %v426 = vpack.c.b16 %v413, %v412
        %v427 = vpack.c.b16 %v415, %v414
        %v428 = vpack.c.b16 %v417, %v416
        %v429 = vpack.c.b16 %v419, %v418
        %v430 = vpack.c.b16 %v421, %v420
        %v431 = vpack.c.b16 %v423, %v422
        %vm432 = vcmask 261120
        %v434 = vsel %vm432, %v424, 0
        %v437 = vsel %vm432, %v425, 0
        %v440 = vsel %vm432, %v426, 0
        %v443 = vsel %vm432, %v427, 0
        %v446 = vsel %vm432, %v428, 0
        %v449 = vsel %vm432, %v429, 0
        %v452 = vsel %vm432, %v430, 0
        %v455 = vsel %vm432, %v431, 0
        %457 = vmatpush.bf16.msra.mxu0 0
        %458 = vmatpush.bf16.msra.mxu0 0
        %459 = vmatpush.bf16.msra.mxu0 0
        %460 = vmatpush.bf16.msra.mxu0 0
        %461 = vmatpush.bf16.msra.mxu0 0
        %462 = vmatpush.bf16.msra.mxu0 0
        %463 = vmatpush.bf16.msra.mxu0 %v391
        %464 = vmatpush.bf16.msra.mxu0 %v390
        %465 = vmatmul.bf16.gmra.mxu0 %v434
        %v466 = vpop.f32.mrf.mxu0
        %v467 = vadd.f32 0.0, %v466
        %v468 = vpop.f32.mrf.mxu0
        %v469 = vadd.f32 0.0, %v468
        %470 = vmatmul.bf16.gmra.mxu0 %v437
        %v471 = vpop.f32.mrf.mxu0
        %v472 = vadd.f32 0.0, %v471
        %v473 = vpop.f32.mrf.mxu0
        %v474 = vadd.f32 0.0, %v473
        %475 = vmatmul.bf16.gmra.mxu0 %v440
        %v476 = vpop.f32.mrf.mxu0
        %v477 = vadd.f32 0.0, %v476
        %v478 = vpop.f32.mrf.mxu0
        %v479 = vadd.f32 0.0, %v478
        %480 = vmatmul.bf16.gmra.mxu0 %v443
        %v481 = vpop.f32.mrf.mxu0
        %v482 = vadd.f32 0.0, %v481
        %v483 = vpop.f32.mrf.mxu0
        %v484 = vadd.f32 0.0, %v483
        %485 = vmatmul.bf16.gmra.mxu0 %v446
        %v486 = vpop.f32.mrf.mxu0
        %v487 = vadd.f32 0.0, %v486
        %v488 = vpop.f32.mrf.mxu0
        %v489 = vadd.f32 0.0, %v488
        %490 = vmatmul.bf16.gmra.mxu0 %v449
        %v491 = vpop.f32.mrf.mxu0
        %v492 = vadd.f32 0.0, %v491
        %v493 = vpop.f32.mrf.mxu0
        %v494 = vadd.f32 0.0, %v493
        %495 = vmatmul.bf16.gmra.mxu0 %v452
        %v496 = vpop.f32.mrf.mxu0
        %v497 = vadd.f32 0.0, %v496
        %v498 = vpop.f32.mrf.mxu0
        %v499 = vadd.f32 0.0, %v498
        %500 = vmatmul.bf16.gmra.mxu0 %v455
        %v501 = vpop.f32.mrf.mxu0
        %v502 = vadd.f32 0.0, %v501
        %v503 = vpop.f32.mrf.mxu0
        %v504 = vadd.f32 0.0, %v503
        %505 = vdwg.mxu0
        %v506 = vadd.f32 %v374, %v467
        %v507 = vadd.f32 %v375, %v469
        %v508 = vadd.f32 %v376, %v472
        %v509 = vadd.f32 %v377, %v474
        %v510 = vadd.f32 %v378, %v477
        %v511 = vadd.f32 %v379, %v479
        %v512 = vadd.f32 %v380, %v482
        %v513 = vadd.f32 %v381, %v484
        %v514 = vadd.f32 %v382, %v487
        %v515 = vadd.f32 %v383, %v489
        %v516 = vadd.f32 %v384, %v492
        %v517 = vadd.f32 %v385, %v494
        %v518 = vadd.f32 %v386, %v497
        %v519 = vadd.f32 %v387, %v499
        %v520 = vadd.f32 %v388, %v502
        %v521 = vadd.f32 %v389, %v504
        %v522 = vxor.u32 %v506, 2147483648
        %v523 = vxor.u32 %v507, 2147483648
        %v524 = vxor.u32 %v508, 2147483648
        %v525 = vxor.u32 %v509, 2147483648
        %v526 = vxor.u32 %v510, 2147483648
        %v527 = vxor.u32 %v511, 2147483648
        %v528 = vxor.u32 %v512, 2147483648
        %v529 = vxor.u32 %v513, 2147483648
        %v530 = vxor.u32 %v514, 2147483648
        %v531 = vxor.u32 %v515, 2147483648
        %v532 = vxor.u32 %v516, 2147483648
        %v533 = vxor.u32 %v517, 2147483648
        %v534 = vmul.f32 %v522, 1.442695
        %v535 = vpow.pop %v534
        %v536 = vmul.f32 %v523, 1.442695
        %v537 = vpow.pop %v536
        %v538 = vmul.f32 %v524, 1.442695
        %v539 = vpow.pop %v538
        %v540 = vmul.f32 %v525, 1.442695
        %v541 = vpow.pop %v540
        %v542 = vmul.f32 %v526, 1.442695
        %v543 = vpow.pop %v542
        %v544 = vmul.f32 %v527, 1.442695
        %v545 = vpow.pop %v544
        %v546 = vmul.f32 %v528, 1.442695
        %v547 = vpow.pop %v546
        %v548 = vmul.f32 %v529, 1.442695
        %v549 = vpow.pop %v548
        %v550 = vmul.f32 %v530, 1.442695
        %v551 = vpow.pop %v550
        %v552 = vmul.f32 %v531, 1.442695
        %v553 = vpow.pop %v552
        %v554 = vmul.f32 %v532, 1.442695
        %v555 = vpow.pop %v554
        %v556 = vmul.f32 %v533, 1.442695
        %v557 = vpow.pop %v556
        %v558 = vadd.f32 %v535, 1.0
        %v559 = vadd.f32 %v537, 1.0
        %v560 = vadd.f32 %v539, 1.0
        %v561 = vadd.f32 %v541, 1.0
        %v562 = vadd.f32 %v543, 1.0
        %v563 = vadd.f32 %v545, 1.0
        %v564 = vadd.f32 %v547, 1.0
        %v565 = vadd.f32 %v549, 1.0
        %v566 = vadd.f32 %v551, 1.0
        %v567 = vadd.f32 %v553, 1.0
        %v568 = vadd.f32 %v555, 1.0
        %v569 = vadd.f32 %v557, 1.0
        %v570 = vrcp.pop %v558
        %v571 = vmul.f32 %v558, %v570
        %v572 = vsub.f32 1.0, %v571
        %v573 = vmul.f32 %v570, %v572
        %v574 = vadd.f32 %v570, %v573
        %vm575 = vweird.f32 %v558
        %vm576 = vweird.f32 %v570
        %vm577 = vmor %vm575, %vm576
        %v578 = vsel %vm577, %v570, %v574
        %v579 = vand.u32 2147483647, %v558
        %vm580 = vcmp.eq.f32.partialorder %v579, 8.507059e+37
        %v581 = vand.u32 %v558, 2147483648
        %v582 = vor.u32 1.1754944e-38, %v581
        %v583 = vsel %vm580, %v582, %v578
        %v584 = vmul.f32 1.0, %v583
        %v585 = vrcp.pop %v559
        %v586 = vmul.f32 %v559, %v585
        %v587 = vsub.f32 1.0, %v586
        %v588 = vmul.f32 %v585, %v587
        %v589 = vadd.f32 %v585, %v588
        %vm590 = vweird.f32 %v559
        %vm591 = vweird.f32 %v585
        %vm592 = vmor %vm590, %vm591
        %v593 = vsel %vm592, %v585, %v589
        %v594 = vand.u32 2147483647, %v559
        %vm595 = vcmp.eq.f32.partialorder %v594, 8.507059e+37
        %v596 = vand.u32 %v559, 2147483648
        %v597 = vor.u32 1.1754944e-38, %v596
        %v598 = vsel %vm595, %v597, %v593
        %v599 = vmul.f32 1.0, %v598
        %v600 = vrcp.pop %v560
        %v601 = vmul.f32 %v560, %v600
        %v602 = vsub.f32 1.0, %v601
        %v603 = vmul.f32 %v600, %v602
        %v604 = vadd.f32 %v600, %v603
        %vm605 = vweird.f32 %v560
        %vm606 = vweird.f32 %v600
        %vm607 = vmor %vm605, %vm606
        %v608 = vsel %vm607, %v600, %v604
        %v609 = vand.u32 2147483647, %v560
        %vm610 = vcmp.eq.f32.partialorder %v609, 8.507059e+37
        %v611 = vand.u32 %v560, 2147483648
        %v612 = vor.u32 1.1754944e-38, %v611
        %v613 = vsel %vm610, %v612, %v608
        %v614 = vmul.f32 1.0, %v613
        %v615 = vrcp.pop %v561
        %v616 = vmul.f32 %v561, %v615
        %v617 = vsub.f32 1.0, %v616
        %v618 = vmul.f32 %v615, %v617
        %v619 = vadd.f32 %v615, %v618
        %vm620 = vweird.f32 %v561
        %vm621 = vweird.f32 %v615
        %vm622 = vmor %vm620, %vm621
        %v623 = vsel %vm622, %v615, %v619
        %v624 = vand.u32 2147483647, %v561
        %vm625 = vcmp.eq.f32.partialorder %v624, 8.507059e+37
        %v626 = vand.u32 %v561, 2147483648
        %v627 = vor.u32 1.1754944e-38, %v626
        %v628 = vsel %vm625, %v627, %v623
        %v629 = vmul.f32 1.0, %v628
        %v630 = vrcp.pop %v562
        %v631 = vmul.f32 %v562, %v630
        %v632 = vsub.f32 1.0, %v631
        %v633 = vmul.f32 %v630, %v632
        %v634 = vadd.f32 %v630, %v633
        %vm635 = vweird.f32 %v562
        %vm636 = vweird.f32 %v630
        %vm637 = vmor %vm635, %vm636
        %v638 = vsel %vm637, %v630, %v634
        %v639 = vand.u32 2147483647, %v562
        %vm640 = vcmp.eq.f32.partialorder %v639, 8.507059e+37
        %v641 = vand.u32 %v562, 2147483648
        %v642 = vor.u32 1.1754944e-38, %v641
        %v643 = vsel %vm640, %v642, %v638
        %v644 = vmul.f32 1.0, %v643
        %v645 = vrcp.pop %v563
        %v646 = vmul.f32 %v563, %v645
        %v647 = vsub.f32 1.0, %v646
        %v648 = vmul.f32 %v645, %v647
        %v649 = vadd.f32 %v645, %v648
        %vm650 = vweird.f32 %v563
        %vm651 = vweird.f32 %v645
        %vm652 = vmor %vm650, %vm651
        %v653 = vsel %vm652, %v645, %v649
        %v654 = vand.u32 2147483647, %v563
        %vm655 = vcmp.eq.f32.partialorder %v654, 8.507059e+37
        %v656 = vand.u32 %v563, 2147483648
        %v657 = vor.u32 1.1754944e-38, %v656
        %v658 = vsel %vm655, %v657, %v653
        %v659 = vmul.f32 1.0, %v658
        %v660 = vrcp.pop %v564
        %v661 = vmul.f32 %v564, %v660
        %v662 = vsub.f32 1.0, %v661
        %v663 = vmul.f32 %v660, %v662
        %v664 = vadd.f32 %v660, %v663
        %vm665 = vweird.f32 %v564
        %vm666 = vweird.f32 %v660
        %vm667 = vmor %vm665, %vm666
        %v668 = vsel %vm667, %v660, %v664
        %v669 = vand.u32 2147483647, %v564
        %vm670 = vcmp.eq.f32.partialorder %v669, 8.507059e+37
        %v671 = vand.u32 %v564, 2147483648
        %v672 = vor.u32 1.1754944e-38, %v671
        %v673 = vsel %vm670, %v672, %v668
        %v674 = vmul.f32 1.0, %v673
        %v675 = vrcp.pop %v565
        %v676 = vmul.f32 %v565, %v675
        %v677 = vsub.f32 1.0, %v676
        %v678 = vmul.f32 %v675, %v677
        %v679 = vadd.f32 %v675, %v678
        %vm680 = vweird.f32 %v565
        %vm681 = vweird.f32 %v675
        %vm682 = vmor %vm680, %vm681
        %v683 = vsel %vm682, %v675, %v679
        %v684 = vand.u32 2147483647, %v565
        %vm685 = vcmp.eq.f32.partialorder %v684, 8.507059e+37
        %v686 = vand.u32 %v565, 2147483648
        %v687 = vor.u32 1.1754944e-38, %v686
        %v688 = vsel %vm685, %v687, %v683
        %v689 = vmul.f32 1.0, %v688
        %v690 = vrcp.pop %v566
        %v691 = vmul.f32 %v566, %v690
        %v692 = vsub.f32 1.0, %v691
        %v693 = vmul.f32 %v690, %v692
        %v694 = vadd.f32 %v690, %v693
        %vm695 = vweird.f32 %v566
        %vm696 = vweird.f32 %v690
        %vm697 = vmor %vm695, %vm696
        %v698 = vsel %vm697, %v690, %v694
        %v699 = vand.u32 2147483647, %v566
        %vm700 = vcmp.eq.f32.partialorder %v699, 8.507059e+37
        %v701 = vand.u32 %v566, 2147483648
        %v702 = vor.u32 1.1754944e-38, %v701
        %v703 = vsel %vm700, %v702, %v698
        %v704 = vmul.f32 1.0, %v703
        %v705 = vrcp.pop %v567
        %v706 = vmul.f32 %v567, %v705
        %v707 = vsub.f32 1.0, %v706
        %v708 = vmul.f32 %v705, %v707
        %v709 = vadd.f32 %v705, %v708
        %vm710 = vweird.f32 %v567
        %vm711 = vweird.f32 %v705
        %vm712 = vmor %vm710, %vm711
        %v713 = vsel %vm712, %v705, %v709
        %v714 = vand.u32 2147483647, %v567
        %vm715 = vcmp.eq.f32.partialorder %v714, 8.507059e+37
        %v716 = vand.u32 %v567, 2147483648
        %v717 = vor.u32 1.1754944e-38, %v716
        %v718 = vsel %vm715, %v717, %v713
        %v719 = vmul.f32 1.0, %v718
        %v720 = vrcp.pop %v568
        %v721 = vmul.f32 %v568, %v720
        %v722 = vsub.f32 1.0, %v721
        %v723 = vmul.f32 %v720, %v722
        %v724 = vadd.f32 %v720, %v723
        %vm725 = vweird.f32 %v568
        %vm726 = vweird.f32 %v720
        %vm727 = vmor %vm725, %vm726
        %v728 = vsel %vm727, %v720, %v724
        %v729 = vand.u32 2147483647, %v568
        %vm730 = vcmp.eq.f32.partialorder %v729, 8.507059e+37
        %v731 = vand.u32 %v568, 2147483648
        %v732 = vor.u32 1.1754944e-38, %v731
        %v733 = vsel %vm730, %v732, %v728
        %v734 = vmul.f32 1.0, %v733
        %v735 = vrcp.pop %v569
        %v736 = vmul.f32 %v569, %v735
        %v737 = vsub.f32 1.0, %v736
        %v738 = vmul.f32 %v735, %v737
        %v739 = vadd.f32 %v735, %v738
        %vm740 = vweird.f32 %v569
        %vm741 = vweird.f32 %v735
        %vm742 = vmor %vm740, %vm741
        %v743 = vsel %vm742, %v735, %v739
        %v744 = vand.u32 2147483647, %v569
        %vm745 = vcmp.eq.f32.partialorder %v744, 8.507059e+37
        %v746 = vand.u32 %v569, 2147483648
        %v747 = vor.u32 1.1754944e-38, %v746
        %v748 = vsel %vm745, %v747, %v743
        %v749 = vmul.f32 1.0, %v748
        %v750 = vtanh.pop %v518
        %v751 = vtanh.pop %v519
        %v752 = vtanh.pop %v520
        %v753 = vtanh.pop %v521
        %v754 = vmul.f32 %v644, %v370
        %v755 = vmul.f32 %v659, %v371
        %v756 = vmul.f32 %v674, %v372
        %v757 = vmul.f32 %v689, %v373
        %v758 = vmul.f32 %v584, %v750
        %v759 = vmul.f32 %v599, %v751
        %v760 = vmul.f32 %v614, %v752
        %v761 = vmul.f32 %v629, %v753
        %v762 = vadd.f32 %v754, %v758
        %v763 = vadd.f32 %v755, %v759
        %v764 = vadd.f32 %v756, %v760
        %v765 = vadd.f32 %v757, %v761
        %v766 = vtanh.pop %v762
        %v767 = vtanh.pop %v763
        %v768 = vtanh.pop %v764
        %v769 = vtanh.pop %v765
        %v770 = vmul.f32 %v704, %v766
        %v771 = vmul.f32 %v719, %v767
        %v772 = vmul.f32 %v734, %v768
        %v773 = vmul.f32 %v749, %v769
        %v774 = vstv %s365
        %vm775 = vcmp.lt.s32.totalorder %v774, %v364
        %v776 = vsel %vm775, 1, 0
        %v777 = vperm.slane %v776, 0
        %vm778 = vcmp.eq.s32.totalorder %v777, 1
        %v779 = vsel %vm778, %v770, %v366
        %v780 = vsel %vm778, %v771, %v367
        %v781 = vsel %vm778, %v772, %v368
        %v782 = vsel %vm778, %v773, %v369
        %v783 = vsel %vm778, %v762, %v370
        %v784 = vsel %vm778, %v763, %v371
        %v785 = vsel %vm778, %v764, %v372
        %v786 = vsel %vm778, %v765, %v373
        %v787 = vsel %vm778, %v770, 0.0
        %v788 = vsel %vm778, %v771, 0.0
        %v789 = vsel %vm778, %v772, 0.0
        %v790 = vsel %vm778, %v773, 0.0
        %v791 = vpack.c.bf16 %v788, %v787
        %v792 = vpack.c.bf16 %v790, %v789
        %794 = vset.pattern.permute.xlu0 0
        %795 = vperm.xlu0 %794, %v358
        %v796 = vpop.permute.xlu0 %795
        %799 = vset.pattern.permute.xlu0 0
        %800 = vperm.xlu0 %799, %v359
        %v801 = vpop.permute.xlu0 %800
        %804 = vset.pattern.permute.xlu0 0
        %805 = vperm.xlu0 %804, %v360
        %v806 = vpop.permute.xlu0 %805
        %809 = vset.pattern.permute.xlu0 0
        %810 = vperm.xlu0 %809, %v361
        %v811 = vpop.permute.xlu0 %810
        %v817 = vunpack.c.l.b16 %v354
        %v818 = vunpack.c.l.b16 %v355
        %v819 = vunpack.c.l.b16 %v356
        %v820 = vunpack.c.l.b16 %v357
        %v821 = vpack.c.b16 %v818, %v817
        %v822 = vpack.c.b16 %v820, %v819
        %v824 = vsel %vm432, %v821, 0
        %v827 = vsel %vm432, %v822, 0
        %829 = vmatpush.bf16.msra.mxu0 0
        %830 = vmatpush.bf16.msra.mxu0 0
        %831 = vmatpush.bf16.msra.mxu0 0
        %832 = vmatpush.bf16.msra.mxu0 0
        %833 = vmatpush.bf16.msra.mxu0 0
        %834 = vmatpush.bf16.msra.mxu0 0
        %835 = vmatpush.bf16.msra.mxu0 %v792
        %836 = vmatpush.bf16.msra.mxu0 %v791
        %837 = vmatmul.bf16.gmra.mxu0 %v824
        %v838 = vpop.f32.mrf.mxu0
        %v839 = vadd.f32 %v796, %v838
        %v840 = vpop.f32.mrf.mxu0
        %v841 = vadd.f32 %v801, %v840
        %842 = vmatmul.bf16.gmra.mxu0 %v827
        %v843 = vpop.f32.mrf.mxu0
        %v844 = vadd.f32 %v806, %v843
        %v845 = vpop.f32.mrf.mxu0
        %v846 = vadd.f32 %v811, %v845
        %847 = vdwg.mxu0
        %v848 = vmax.f32 %v839, 0.0
        %v849 = vmax.f32 %v841, 0.0
        %v850 = vmax.f32 %v844, 0.0
        %v851 = vmax.f32 %v846, 0.0
        %v852 = vpack.c.bf16 %v849, %v848
        %v853 = vpack.c.bf16 %v851, %v850
        %855 = vset.pattern.permute.xlu0 0
        %856 = vperm.xlu0 %855, %v363
        %v857 = vpop.permute.xlu0 %856
        %v859 = vperm.slane %v857, 0
        %v861 = vsel %vm432, %v362, 0
        %863 = vmatpush.bf16.msra.mxu0 0
        %864 = vmatpush.bf16.msra.mxu0 0
        %865 = vmatpush.bf16.msra.mxu0 0
        %866 = vmatpush.bf16.msra.mxu0 0
        %867 = vmatpush.bf16.msra.mxu0 0
        %868 = vmatpush.bf16.msra.mxu0 0
        %869 = vmatpush.bf16.msra.mxu0 %v853
        %870 = vmatpush.bf16.msra.mxu0 %v852
        %871 = vmatmul.bf16.gmra.mxu0 %v861
        %v872 = vpop.f32.mrf.mxu0
        %v873 = vadd.f32 %v859, %v872
        %v874 = vpop.f32.mrf.mxu0
        %875 = vdwg.mxu0
        %v876 = vxor.u32 %v873, 2147483648
        %v877 = vmul.f32 %v876, 1.442695
        %v878 = vpow.pop %v877
        %v879 = vadd.f32 %v878, 1.0
        %v880 = vrcp.pop %v879
        %v881 = vmul.f32 %v879, %v880
        %v882 = vsub.f32 1.0, %v881
        %v883 = vmul.f32 %v880, %v882
        %v884 = vadd.f32 %v880, %v883
        %vm885 = vweird.f32 %v879
        %vm886 = vweird.f32 %v880
        %vm887 = vmor %vm885, %vm886
        %v888 = vsel %vm887, %v880, %v884
        %v889 = vand.u32 2147483647, %v879
        %vm890 = vcmp.eq.f32.partialorder %v889, 8.507059e+37
        %v891 = vand.u32 %v879, 2147483648
        %v892 = vor.u32 1.1754944e-38, %v891
        %v893 = vsel %vm890, %v892, %v888
        %v894 = vmul.f32 1.0, %v893
        %vm895 = vcmask 57344
        %896 = vst.msk [vmem:[%s309] sm:$0x1] %vm895, %v894
        %s897 = scalar_lea.vmem %s321, 128
        %v898 = vld [vmem:[%s897] sm:$0xff]
        %v899 = vld [vmem:[%s897 + $0x8] sm:$0xff]
        %v900 = vld [vmem:[%s897 + $0x10] sm:$0xff]
        %v901 = vld [vmem:[%s897 + $0x18] sm:$0xff]
        %v902 = vld [vmem:[%s897 + $0x20] sm:$0xff]
        %v903 = vld [vmem:[%s897 + $0x28] sm:$0xff]
        %v904 = vld [vmem:[%s897 + $0x30] sm:$0xff]
        %v905 = vld [vmem:[%s897 + $0x38] sm:$0xff]
        %v906 = vld [vmem:[%s897 + $0x40] sm:$0xff]
        %v907 = vld [vmem:[%s897 + $0x48] sm:$0xff]
        %v908 = vld [vmem:[%s897 + $0x50] sm:$0xff]
        %v909 = vld [vmem:[%s897 + $0x58] sm:$0xff]
        %v910 = vld [vmem:[%s897 + $0x60] sm:$0xff]
        %v911 = vld [vmem:[%s897 + $0x68] sm:$0xff]
        %v912 = vld [vmem:[%s897 + $0x70] sm:$0xff]
        %v913 = vld [vmem:[%s897 + $0x78] sm:$0xff]
        %v914 = vpack.c.bf16 %v780, %v779
        %v915 = vpack.c.bf16 %v782, %v781
        %916 = vmatpush.bf16.msra.mxu0 0
        %917 = vmatpush.bf16.msra.mxu0 0
        %918 = vmatpush.bf16.msra.mxu0 0
        %919 = vmatpush.bf16.msra.mxu0 0
        %920 = vmatpush.bf16.msra.mxu0 0
        %921 = vmatpush.bf16.msra.mxu0 0
        %922 = vmatpush.bf16.msra.mxu0 %v915
        %923 = vmatpush.bf16.msra.mxu0 %v914
        %924 = vmatmul.bf16.gmra.mxu0 %v434
        %v925 = vpop.f32.mrf.mxu0
        %v926 = vadd.f32 0.0, %v925
        %v927 = vpop.f32.mrf.mxu0
        %v928 = vadd.f32 0.0, %v927
        %929 = vmatmul.bf16.gmra.mxu0 %v437
        %v930 = vpop.f32.mrf.mxu0
        %v931 = vadd.f32 0.0, %v930
        %v932 = vpop.f32.mrf.mxu0
        %v933 = vadd.f32 0.0, %v932
        %934 = vmatmul.bf16.gmra.mxu0 %v440
        %v935 = vpop.f32.mrf.mxu0
        %v936 = vadd.f32 0.0, %v935
        %v937 = vpop.f32.mrf.mxu0
        %v938 = vadd.f32 0.0, %v937
        %939 = vmatmul.bf16.gmra.mxu0 %v443
        %v940 = vpop.f32.mrf.mxu0
        %v941 = vadd.f32 0.0, %v940
        %v942 = vpop.f32.mrf.mxu0
        %v943 = vadd.f32 0.0, %v942
        %944 = vmatmul.bf16.gmra.mxu0 %v446
        %v945 = vpop.f32.mrf.mxu0
        %v946 = vadd.f32 0.0, %v945
        %v947 = vpop.f32.mrf.mxu0
        %v948 = vadd.f32 0.0, %v947
        %949 = vmatmul.bf16.gmra.mxu0 %v449
        %v950 = vpop.f32.mrf.mxu0
        %v951 = vadd.f32 0.0, %v950
        %v952 = vpop.f32.mrf.mxu0
        %v953 = vadd.f32 0.0, %v952
        %954 = vmatmul.bf16.gmra.mxu0 %v452
        %v955 = vpop.f32.mrf.mxu0
        %v956 = vadd.f32 0.0, %v955
        %v957 = vpop.f32.mrf.mxu0
        %v958 = vadd.f32 0.0, %v957
        %959 = vmatmul.bf16.gmra.mxu0 %v455
        %v960 = vpop.f32.mrf.mxu0
        %v961 = vadd.f32 0.0, %v960
        %v962 = vpop.f32.mrf.mxu0
        %v963 = vadd.f32 0.0, %v962
        %964 = vdwg.mxu0
        %v965 = vadd.f32 %v898, %v926
        %v966 = vadd.f32 %v899, %v928
        %v967 = vadd.f32 %v900, %v931
        %v968 = vadd.f32 %v901, %v933
        %v969 = vadd.f32 %v902, %v936
        %v970 = vadd.f32 %v903, %v938
        %v971 = vadd.f32 %v904, %v941
        %v972 = vadd.f32 %v905, %v943
        %v973 = vadd.f32 %v906, %v946
        %v974 = vadd.f32 %v907, %v948
        %v975 = vadd.f32 %v908, %v951
        %v976 = vadd.f32 %v909, %v953
        %v977 = vadd.f32 %v910, %v956
        %v978 = vadd.f32 %v911, %v958
        %v979 = vadd.f32 %v912, %v961
        %v980 = vadd.f32 %v913, %v963
        %v981 = vxor.u32 %v965, 2147483648
        %v982 = vxor.u32 %v966, 2147483648
        %v983 = vxor.u32 %v967, 2147483648
        %v984 = vxor.u32 %v968, 2147483648
        %v985 = vxor.u32 %v969, 2147483648
        %v986 = vxor.u32 %v970, 2147483648
        %v987 = vxor.u32 %v971, 2147483648
        %v988 = vxor.u32 %v972, 2147483648
        %v989 = vxor.u32 %v973, 2147483648
        %v990 = vxor.u32 %v974, 2147483648
        %v991 = vxor.u32 %v975, 2147483648
        %v992 = vxor.u32 %v976, 2147483648
        %v993 = vmul.f32 %v981, 1.442695
        %v994 = vpow.pop %v993
        %v995 = vmul.f32 %v982, 1.442695
        %v996 = vpow.pop %v995
        %v997 = vmul.f32 %v983, 1.442695
        %v998 = vpow.pop %v997
        %v999 = vmul.f32 %v984, 1.442695
        %v1000 = vpow.pop %v999
        %v1001 = vmul.f32 %v985, 1.442695
        %v1002 = vpow.pop %v1001
        %v1003 = vmul.f32 %v986, 1.442695
        %v1004 = vpow.pop %v1003
        %v1005 = vmul.f32 %v987, 1.442695
        %v1006 = vpow.pop %v1005
        %v1007 = vmul.f32 %v988, 1.442695
        %v1008 = vpow.pop %v1007
        %v1009 = vmul.f32 %v989, 1.442695
        %v1010 = vpow.pop %v1009
        %v1011 = vmul.f32 %v990, 1.442695
        %v1012 = vpow.pop %v1011
        %v1013 = vmul.f32 %v991, 1.442695
        %v1014 = vpow.pop %v1013
        %v1015 = vmul.f32 %v992, 1.442695
        %v1016 = vpow.pop %v1015
        %v1017 = vadd.f32 %v994, 1.0
        %v1018 = vadd.f32 %v996, 1.0
        %v1019 = vadd.f32 %v998, 1.0
        %v1020 = vadd.f32 %v1000, 1.0
        %v1021 = vadd.f32 %v1002, 1.0
        %v1022 = vadd.f32 %v1004, 1.0
        %v1023 = vadd.f32 %v1006, 1.0
        %v1024 = vadd.f32 %v1008, 1.0
        %v1025 = vadd.f32 %v1010, 1.0
        %v1026 = vadd.f32 %v1012, 1.0
        %v1027 = vadd.f32 %v1014, 1.0
        %v1028 = vadd.f32 %v1016, 1.0
        %v1029 = vrcp.pop %v1017
        %v1030 = vmul.f32 %v1017, %v1029
        %v1031 = vsub.f32 1.0, %v1030
        %v1032 = vmul.f32 %v1029, %v1031
        %v1033 = vadd.f32 %v1029, %v1032
        %vm1034 = vweird.f32 %v1017
        %vm1035 = vweird.f32 %v1029
        %vm1036 = vmor %vm1034, %vm1035
        %v1037 = vsel %vm1036, %v1029, %v1033
        %v1038 = vand.u32 2147483647, %v1017
        %vm1039 = vcmp.eq.f32.partialorder %v1038, 8.507059e+37
        %v1040 = vand.u32 %v1017, 2147483648
        %v1041 = vor.u32 1.1754944e-38, %v1040
        %v1042 = vsel %vm1039, %v1041, %v1037
        %v1043 = vmul.f32 1.0, %v1042
        %v1044 = vrcp.pop %v1018
        %v1045 = vmul.f32 %v1018, %v1044
        %v1046 = vsub.f32 1.0, %v1045
        %v1047 = vmul.f32 %v1044, %v1046
        %v1048 = vadd.f32 %v1044, %v1047
        %vm1049 = vweird.f32 %v1018
        %vm1050 = vweird.f32 %v1044
        %vm1051 = vmor %vm1049, %vm1050
        %v1052 = vsel %vm1051, %v1044, %v1048
        %v1053 = vand.u32 2147483647, %v1018
        %vm1054 = vcmp.eq.f32.partialorder %v1053, 8.507059e+37
        %v1055 = vand.u32 %v1018, 2147483648
        %v1056 = vor.u32 1.1754944e-38, %v1055
        %v1057 = vsel %vm1054, %v1056, %v1052
        %v1058 = vmul.f32 1.0, %v1057
        %v1059 = vrcp.pop %v1019
        %v1060 = vmul.f32 %v1019, %v1059
        %v1061 = vsub.f32 1.0, %v1060
        %v1062 = vmul.f32 %v1059, %v1061
        %v1063 = vadd.f32 %v1059, %v1062
        %vm1064 = vweird.f32 %v1019
        %vm1065 = vweird.f32 %v1059
        %vm1066 = vmor %vm1064, %vm1065
        %v1067 = vsel %vm1066, %v1059, %v1063
        %v1068 = vand.u32 2147483647, %v1019
        %vm1069 = vcmp.eq.f32.partialorder %v1068, 8.507059e+37
        %v1070 = vand.u32 %v1019, 2147483648
        %v1071 = vor.u32 1.1754944e-38, %v1070
        %v1072 = vsel %vm1069, %v1071, %v1067
        %v1073 = vmul.f32 1.0, %v1072
        %v1074 = vrcp.pop %v1020
        %v1075 = vmul.f32 %v1020, %v1074
        %v1076 = vsub.f32 1.0, %v1075
        %v1077 = vmul.f32 %v1074, %v1076
        %v1078 = vadd.f32 %v1074, %v1077
        %vm1079 = vweird.f32 %v1020
        %vm1080 = vweird.f32 %v1074
        %vm1081 = vmor %vm1079, %vm1080
        %v1082 = vsel %vm1081, %v1074, %v1078
        %v1083 = vand.u32 2147483647, %v1020
        %vm1084 = vcmp.eq.f32.partialorder %v1083, 8.507059e+37
        %v1085 = vand.u32 %v1020, 2147483648
        %v1086 = vor.u32 1.1754944e-38, %v1085
        %v1087 = vsel %vm1084, %v1086, %v1082
        %v1088 = vmul.f32 1.0, %v1087
        %v1089 = vrcp.pop %v1021
        %v1090 = vmul.f32 %v1021, %v1089
        %v1091 = vsub.f32 1.0, %v1090
        %v1092 = vmul.f32 %v1089, %v1091
        %v1093 = vadd.f32 %v1089, %v1092
        %vm1094 = vweird.f32 %v1021
        %vm1095 = vweird.f32 %v1089
        %vm1096 = vmor %vm1094, %vm1095
        %v1097 = vsel %vm1096, %v1089, %v1093
        %v1098 = vand.u32 2147483647, %v1021
        %vm1099 = vcmp.eq.f32.partialorder %v1098, 8.507059e+37
        %v1100 = vand.u32 %v1021, 2147483648
        %v1101 = vor.u32 1.1754944e-38, %v1100
        %v1102 = vsel %vm1099, %v1101, %v1097
        %v1103 = vmul.f32 1.0, %v1102
        %v1104 = vrcp.pop %v1022
        %v1105 = vmul.f32 %v1022, %v1104
        %v1106 = vsub.f32 1.0, %v1105
        %v1107 = vmul.f32 %v1104, %v1106
        %v1108 = vadd.f32 %v1104, %v1107
        %vm1109 = vweird.f32 %v1022
        %vm1110 = vweird.f32 %v1104
        %vm1111 = vmor %vm1109, %vm1110
        %v1112 = vsel %vm1111, %v1104, %v1108
        %v1113 = vand.u32 2147483647, %v1022
        %vm1114 = vcmp.eq.f32.partialorder %v1113, 8.507059e+37
        %v1115 = vand.u32 %v1022, 2147483648
        %v1116 = vor.u32 1.1754944e-38, %v1115
        %v1117 = vsel %vm1114, %v1116, %v1112
        %v1118 = vmul.f32 1.0, %v1117
        %v1119 = vrcp.pop %v1023
        %v1120 = vmul.f32 %v1023, %v1119
        %v1121 = vsub.f32 1.0, %v1120
        %v1122 = vmul.f32 %v1119, %v1121
        %v1123 = vadd.f32 %v1119, %v1122
        %vm1124 = vweird.f32 %v1023
        %vm1125 = vweird.f32 %v1119
        %vm1126 = vmor %vm1124, %vm1125
        %v1127 = vsel %vm1126, %v1119, %v1123
        %v1128 = vand.u32 2147483647, %v1023
        %vm1129 = vcmp.eq.f32.partialorder %v1128, 8.507059e+37
        %v1130 = vand.u32 %v1023, 2147483648
        %v1131 = vor.u32 1.1754944e-38, %v1130
        %v1132 = vsel %vm1129, %v1131, %v1127
        %v1133 = vmul.f32 1.0, %v1132
        %v1134 = vrcp.pop %v1024
        %v1135 = vmul.f32 %v1024, %v1134
        %v1136 = vsub.f32 1.0, %v1135
        %v1137 = vmul.f32 %v1134, %v1136
        %v1138 = vadd.f32 %v1134, %v1137
        %vm1139 = vweird.f32 %v1024
        %vm1140 = vweird.f32 %v1134
        %vm1141 = vmor %vm1139, %vm1140
        %v1142 = vsel %vm1141, %v1134, %v1138
        %v1143 = vand.u32 2147483647, %v1024
        %vm1144 = vcmp.eq.f32.partialorder %v1143, 8.507059e+37
        %v1145 = vand.u32 %v1024, 2147483648
        %v1146 = vor.u32 1.1754944e-38, %v1145
        %v1147 = vsel %vm1144, %v1146, %v1142
        %v1148 = vmul.f32 1.0, %v1147
        %v1149 = vrcp.pop %v1025
        %v1150 = vmul.f32 %v1025, %v1149
        %v1151 = vsub.f32 1.0, %v1150
        %v1152 = vmul.f32 %v1149, %v1151
        %v1153 = vadd.f32 %v1149, %v1152
        %vm1154 = vweird.f32 %v1025
        %vm1155 = vweird.f32 %v1149
        %vm1156 = vmor %vm1154, %vm1155
        %v1157 = vsel %vm1156, %v1149, %v1153
        %v1158 = vand.u32 2147483647, %v1025
        %vm1159 = vcmp.eq.f32.partialorder %v1158, 8.507059e+37
        %v1160 = vand.u32 %v1025, 2147483648
        %v1161 = vor.u32 1.1754944e-38, %v1160
        %v1162 = vsel %vm1159, %v1161, %v1157
        %v1163 = vmul.f32 1.0, %v1162
        %v1164 = vrcp.pop %v1026
        %v1165 = vmul.f32 %v1026, %v1164
        %v1166 = vsub.f32 1.0, %v1165
        %v1167 = vmul.f32 %v1164, %v1166
        %v1168 = vadd.f32 %v1164, %v1167
        %vm1169 = vweird.f32 %v1026
        %vm1170 = vweird.f32 %v1164
        %vm1171 = vmor %vm1169, %vm1170
        %v1172 = vsel %vm1171, %v1164, %v1168
        %v1173 = vand.u32 2147483647, %v1026
        %vm1174 = vcmp.eq.f32.partialorder %v1173, 8.507059e+37
        %v1175 = vand.u32 %v1026, 2147483648
        %v1176 = vor.u32 1.1754944e-38, %v1175
        %v1177 = vsel %vm1174, %v1176, %v1172
        %v1178 = vmul.f32 1.0, %v1177
        %v1179 = vrcp.pop %v1027
        %v1180 = vmul.f32 %v1027, %v1179
        %v1181 = vsub.f32 1.0, %v1180
        %v1182 = vmul.f32 %v1179, %v1181
        %v1183 = vadd.f32 %v1179, %v1182
        %vm1184 = vweird.f32 %v1027
        %vm1185 = vweird.f32 %v1179
        %vm1186 = vmor %vm1184, %vm1185
        %v1187 = vsel %vm1186, %v1179, %v1183
        %v1188 = vand.u32 2147483647, %v1027
        %vm1189 = vcmp.eq.f32.partialorder %v1188, 8.507059e+37
        %v1190 = vand.u32 %v1027, 2147483648
        %v1191 = vor.u32 1.1754944e-38, %v1190
        %v1192 = vsel %vm1189, %v1191, %v1187
        %v1193 = vmul.f32 1.0, %v1192
        %v1194 = vrcp.pop %v1028
        %v1195 = vmul.f32 %v1028, %v1194
        %v1196 = vsub.f32 1.0, %v1195
        %v1197 = vmul.f32 %v1194, %v1196
        %v1198 = vadd.f32 %v1194, %v1197
        %vm1199 = vweird.f32 %v1028
        %vm1200 = vweird.f32 %v1194
        %vm1201 = vmor %vm1199, %vm1200
        %v1202 = vsel %vm1201, %v1194, %v1198
        %v1203 = vand.u32 2147483647, %v1028
        %vm1204 = vcmp.eq.f32.partialorder %v1203, 8.507059e+37
        %v1205 = vand.u32 %v1028, 2147483648
        %v1206 = vor.u32 1.1754944e-38, %v1205
        %v1207 = vsel %vm1204, %v1206, %v1202
        %v1208 = vmul.f32 1.0, %v1207
        %v1209 = vtanh.pop %v977
        %v1210 = vtanh.pop %v978
        %v1211 = vtanh.pop %v979
        %v1212 = vtanh.pop %v980
        %v1213 = vmul.f32 %v1103, %v783
        %v1214 = vmul.f32 %v1118, %v784
        %v1215 = vmul.f32 %v1133, %v785
        %v1216 = vmul.f32 %v1148, %v786
        %v1217 = vmul.f32 %v1043, %v1209
        %v1218 = vmul.f32 %v1058, %v1210
        %v1219 = vmul.f32 %v1073, %v1211
        %v1220 = vmul.f32 %v1088, %v1212
        %v1221 = vadd.f32 %v1213, %v1217
        %v1222 = vadd.f32 %v1214, %v1218
        %v1223 = vadd.f32 %v1215, %v1219
        %v1224 = vadd.f32 %v1216, %v1220
        %v1225 = vtanh.pop %v1221
        %v1226 = vtanh.pop %v1222
        %v1227 = vtanh.pop %v1223
        %v1228 = vtanh.pop %v1224
        %v1229 = vmul.f32 %v1163, %v1225
        %v1230 = vmul.f32 %v1178, %v1226
        %v1231 = vmul.f32 %v1193, %v1227
        %v1232 = vmul.f32 %v1208, %v1228
        %s1233 = sadd.s32 %s365, 1
        %v1234 = vstv %s1233
        %vm1235 = vcmp.lt.s32.totalorder %v1234, %v364
        %v1236 = vsel %vm1235, 1, 0
        %v1237 = vperm.slane %v1236, 0
        %vm1238 = vcmp.eq.s32.totalorder %v1237, 1
        %v1239 = vsel %vm1238, %v1229, %v779
        %v1240 = vsel %vm1238, %v1230, %v780
        %v1241 = vsel %vm1238, %v1231, %v781
        %v1242 = vsel %vm1238, %v1232, %v782
        %v1243 = vsel %vm1238, %v1221, %v783
        %v1244 = vsel %vm1238, %v1222, %v784
        %v1245 = vsel %vm1238, %v1223, %v785
        %v1246 = vsel %vm1238, %v1224, %v786
        %v1247 = vsel %vm1238, %v1229, 0.0
        %v1248 = vsel %vm1238, %v1230, 0.0
        %v1249 = vsel %vm1238, %v1231, 0.0
        %v1250 = vsel %vm1238, %v1232, 0.0
        %v1251 = vpack.c.bf16 %v1248, %v1247
        %v1252 = vpack.c.bf16 %v1250, %v1249
        %1253 = vmatpush.bf16.msra.mxu0 0
        %1254 = vmatpush.bf16.msra.mxu0 0
        %1255 = vmatpush.bf16.msra.mxu0 0
        %1256 = vmatpush.bf16.msra.mxu0 0
        %1257 = vmatpush.bf16.msra.mxu0 0
        %1258 = vmatpush.bf16.msra.mxu0 0
        %1259 = vmatpush.bf16.msra.mxu0 %v1252
        %1260 = vmatpush.bf16.msra.mxu0 %v1251
        %1261 = vmatmul.bf16.gmra.mxu0 %v824
        %v1262 = vpop.f32.mrf.mxu0
        %v1263 = vadd.f32 %v796, %v1262
        %v1264 = vpop.f32.mrf.mxu0
        %v1265 = vadd.f32 %v801, %v1264
        %1266 = vmatmul.bf16.gmra.mxu0 %v827
        %v1267 = vpop.f32.mrf.mxu0
        %v1268 = vadd.f32 %v806, %v1267
        %v1269 = vpop.f32.mrf.mxu0
        %v1270 = vadd.f32 %v811, %v1269
        %1271 = vdwg.mxu0
        %v1272 = vmax.f32 %v1263, 0.0
        %v1273 = vmax.f32 %v1265, 0.0
        %v1274 = vmax.f32 %v1268, 0.0
        %v1275 = vmax.f32 %v1270, 0.0
        %v1276 = vpack.c.bf16 %v1273, %v1272
        %v1277 = vpack.c.bf16 %v1275, %v1274
        %1278 = vmatpush.bf16.msra.mxu0 0
        %1279 = vmatpush.bf16.msra.mxu0 0
        %1280 = vmatpush.bf16.msra.mxu0 0
        %1281 = vmatpush.bf16.msra.mxu0 0
        %1282 = vmatpush.bf16.msra.mxu0 0
        %1283 = vmatpush.bf16.msra.mxu0 0
        %1284 = vmatpush.bf16.msra.mxu0 %v1277
        %1285 = vmatpush.bf16.msra.mxu0 %v1276
        %1286 = vmatmul.bf16.gmra.mxu0 %v861
        %v1287 = vpop.f32.mrf.mxu0
        %v1288 = vadd.f32 %v859, %v1287
        %v1289 = vpop.f32.mrf.mxu0
        %1290 = vdwg.mxu0
        %v1291 = vxor.u32 %v1288, 2147483648
        %v1292 = vmul.f32 %v1291, 1.442695
        %v1293 = vpow.pop %v1292
        %v1294 = vadd.f32 %v1293, 1.0
        %v1295 = vrcp.pop %v1294
        %v1296 = vmul.f32 %v1294, %v1295
        %v1297 = vsub.f32 1.0, %v1296
        %v1298 = vmul.f32 %v1295, %v1297
        %v1299 = vadd.f32 %v1295, %v1298
        %vm1300 = vweird.f32 %v1294
        %vm1301 = vweird.f32 %v1295
        %vm1302 = vmor %vm1300, %vm1301
        %v1303 = vsel %vm1302, %v1295, %v1299
        %v1304 = vand.u32 2147483647, %v1294
        %vm1305 = vcmp.eq.f32.partialorder %v1304, 8.507059e+37
        %v1306 = vand.u32 %v1294, 2147483648
        %v1307 = vor.u32 1.1754944e-38, %v1306
        %v1308 = vsel %vm1305, %v1307, %v1303
        %v1309 = vmul.f32 1.0, %v1308
        %s1310 = scalar_lea.vmem %s309, 1 [#allocation5]
        %1311 = vst.msk [vmem:[%s1310] sm:$0x1] %vm895, %v1309
        %s1312 = scalar_lea.vmem %s321, 256
        %v1313 = vld [vmem:[%s1312] sm:$0xff]
        %v1314 = vld [vmem:[%s1312 + $0x8] sm:$0xff]
        %v1315 = vld [vmem:[%s1312 + $0x10] sm:$0xff]
        %v1316 = vld [vmem:[%s1312 + $0x18] sm:$0xff]
        %v1317 = vld [vmem:[%s1312 + $0x20] sm:$0xff]
        %v1318 = vld [vmem:[%s1312 + $0x28] sm:$0xff]
        %v1319 = vld [vmem:[%s1312 + $0x30] sm:$0xff]
        %v1320 = vld [vmem:[%s1312 + $0x38] sm:$0xff]
        %v1321 = vld [vmem:[%s1312 + $0x40] sm:$0xff]
        %v1322 = vld [vmem:[%s1312 + $0x48] sm:$0xff]
        %v1323 = vld [vmem:[%s1312 + $0x50] sm:$0xff]
        %v1324 = vld [vmem:[%s1312 + $0x58] sm:$0xff]
        %v1325 = vld [vmem:[%s1312 + $0x60] sm:$0xff]
        %v1326 = vld [vmem:[%s1312 + $0x68] sm:$0xff]
        %v1327 = vld [vmem:[%s1312 + $0x70] sm:$0xff]
        %v1328 = vld [vmem:[%s1312 + $0x78] sm:$0xff]
        %v1329 = vpack.c.bf16 %v1240, %v1239
        %v1330 = vpack.c.bf16 %v1242, %v1241
        %1331 = vmatpush.bf16.msra.mxu0 0
        %1332 = vmatpush.bf16.msra.mxu0 0
        %1333 = vmatpush.bf16.msra.mxu0 0
        %1334 = vmatpush.bf16.msra.mxu0 0
        %1335 = vmatpush.bf16.msra.mxu0 0
        %1336 = vmatpush.bf16.msra.mxu0 0
        %1337 = vmatpush.bf16.msra.mxu0 %v1330
        %1338 = vmatpush.bf16.msra.mxu0 %v1329
        %1339 = vmatmul.bf16.gmra.mxu0 %v434
        %v1340 = vpop.f32.mrf.mxu0
        %v1341 = vadd.f32 0.0, %v1340
        %v1342 = vpop.f32.mrf.mxu0
        %v1343 = vadd.f32 0.0, %v1342
        %1344 = vmatmul.bf16.gmra.mxu0 %v437
        %v1345 = vpop.f32.mrf.mxu0
        %v1346 = vadd.f32 0.0, %v1345
        %v1347 = vpop.f32.mrf.mxu0
        %v1348 = vadd.f32 0.0, %v1347
        %1349 = vmatmul.bf16.gmra.mxu0 %v440
        %v1350 = vpop.f32.mrf.mxu0
        %v1351 = vadd.f32 0.0, %v1350
        %v1352 = vpop.f32.mrf.mxu0
        %v1353 = vadd.f32 0.0, %v1352
        %1354 = vmatmul.bf16.gmra.mxu0 %v443
        %v1355 = vpop.f32.mrf.mxu0
        %v1356 = vadd.f32 0.0, %v1355
        %v1357 = vpop.f32.mrf.mxu0
        %v1358 = vadd.f32 0.0, %v1357
        %1359 = vmatmul.bf16.gmra.mxu0 %v446
        %v1360 = vpop.f32.mrf.mxu0
        %v1361 = vadd.f32 0.0, %v1360
        %v1362 = vpop.f32.mrf.mxu0
        %v1363 = vadd.f32 0.0, %v1362
        %1364 = vmatmul.bf16.gmra.mxu0 %v449
        %v1365 = vpop.f32.mrf.mxu0
        %v1366 = vadd.f32 0.0, %v1365
        %v1367 = vpop.f32.mrf.mxu0
        %v1368 = vadd.f32 0.0, %v1367
        %1369 = vmatmul.bf16.gmra.mxu0 %v452
        %v1370 = vpop.f32.mrf.mxu0
        %v1371 = vadd.f32 0.0, %v1370
        %v1372 = vpop.f32.mrf.mxu0
        %v1373 = vadd.f32 0.0, %v1372
        %1374 = vmatmul.bf16.gmra.mxu0 %v455
        %v1375 = vpop.f32.mrf.mxu0
        %v1376 = vadd.f32 0.0, %v1375
        %v1377 = vpop.f32.mrf.mxu0
        %v1378 = vadd.f32 0.0, %v1377
        %1379 = vdwg.mxu0
        %v1380 = vadd.f32 %v1313, %v1341
        %v1381 = vadd.f32 %v1314, %v1343
        %v1382 = vadd.f32 %v1315, %v1346
        %v1383 = vadd.f32 %v1316, %v1348
        %v1384 = vadd.f32 %v1317, %v1351
        %v1385 = vadd.f32 %v1318, %v1353
        %v1386 = vadd.f32 %v1319, %v1356
        %v1387 = vadd.f32 %v1320, %v1358
        %v1388 = vadd.f32 %v1321, %v1361
        %v1389 = vadd.f32 %v1322, %v1363
        %v1390 = vadd.f32 %v1323, %v1366
        %v1391 = vadd.f32 %v1324, %v1368
        %v1392 = vadd.f32 %v1325, %v1371
        %v1393 = vadd.f32 %v1326, %v1373
        %v1394 = vadd.f32 %v1327, %v1376
        %v1395 = vadd.f32 %v1328, %v1378
        %v1396 = vxor.u32 %v1380, 2147483648
        %v1397 = vxor.u32 %v1381, 2147483648
        %v1398 = vxor.u32 %v1382, 2147483648
        %v1399 = vxor.u32 %v1383, 2147483648
        %v1400 = vxor.u32 %v1384, 2147483648
        %v1401 = vxor.u32 %v1385, 2147483648
        %v1402 = vxor.u32 %v1386, 2147483648
        %v1403 = vxor.u32 %v1387, 2147483648
        %v1404 = vxor.u32 %v1388, 2147483648
        %v1405 = vxor.u32 %v1389, 2147483648
        %v1406 = vxor.u32 %v1390, 2147483648
        %v1407 = vxor.u32 %v1391, 2147483648
        %v1408 = vmul.f32 %v1396, 1.442695
        %v1409 = vpow.pop %v1408
        %v1410 = vmul.f32 %v1397, 1.442695
        %v1411 = vpow.pop %v1410
        %v1412 = vmul.f32 %v1398, 1.442695
        %v1413 = vpow.pop %v1412
        %v1414 = vmul.f32 %v1399, 1.442695
        %v1415 = vpow.pop %v1414
        %v1416 = vmul.f32 %v1400, 1.442695
        %v1417 = vpow.pop %v1416
        %v1418 = vmul.f32 %v1401, 1.442695
        %v1419 = vpow.pop %v1418
        %v1420 = vmul.f32 %v1402, 1.442695
        %v1421 = vpow.pop %v1420
        %v1422 = vmul.f32 %v1403, 1.442695
        %v1423 = vpow.pop %v1422
        %v1424 = vmul.f32 %v1404, 1.442695
        %v1425 = vpow.pop %v1424
        %v1426 = vmul.f32 %v1405, 1.442695
        %v1427 = vpow.pop %v1426
        %v1428 = vmul.f32 %v1406, 1.442695
        %v1429 = vpow.pop %v1428
        %v1430 = vmul.f32 %v1407, 1.442695
        %v1431 = vpow.pop %v1430
        %v1432 = vadd.f32 %v1409, 1.0
        %v1433 = vadd.f32 %v1411, 1.0
        %v1434 = vadd.f32 %v1413, 1.0
        %v1435 = vadd.f32 %v1415, 1.0
        %v1436 = vadd.f32 %v1417, 1.0
        %v1437 = vadd.f32 %v1419, 1.0
        %v1438 = vadd.f32 %v1421, 1.0
        %v1439 = vadd.f32 %v1423, 1.0
        %v1440 = vadd.f32 %v1425, 1.0
        %v1441 = vadd.f32 %v1427, 1.0
        %v1442 = vadd.f32 %v1429, 1.0
        %v1443 = vadd.f32 %v1431, 1.0
        %v1444 = vrcp.pop %v1432
        %v1445 = vmul.f32 %v1432, %v1444
        %v1446 = vsub.f32 1.0, %v1445
        %v1447 = vmul.f32 %v1444, %v1446
        %v1448 = vadd.f32 %v1444, %v1447
        %vm1449 = vweird.f32 %v1432
        %vm1450 = vweird.f32 %v1444
        %vm1451 = vmor %vm1449, %vm1450
        %v1452 = vsel %vm1451, %v1444, %v1448
        %v1453 = vand.u32 2147483647, %v1432
        %vm1454 = vcmp.eq.f32.partialorder %v1453, 8.507059e+37
        %v1455 = vand.u32 %v1432, 2147483648
        %v1456 = vor.u32 1.1754944e-38, %v1455
        %v1457 = vsel %vm1454, %v1456, %v1452
        %v1458 = vmul.f32 1.0, %v1457
        %v1459 = vrcp.pop %v1433
        %v1460 = vmul.f32 %v1433, %v1459
        %v1461 = vsub.f32 1.0, %v1460
        %v1462 = vmul.f32 %v1459, %v1461
        %v1463 = vadd.f32 %v1459, %v1462
        %vm1464 = vweird.f32 %v1433
        %vm1465 = vweird.f32 %v1459
        %vm1466 = vmor %vm1464, %vm1465
        %v1467 = vsel %vm1466, %v1459, %v1463
        %v1468 = vand.u32 2147483647, %v1433
        %vm1469 = vcmp.eq.f32.partialorder %v1468, 8.507059e+37
        %v1470 = vand.u32 %v1433, 2147483648
        %v1471 = vor.u32 1.1754944e-38, %v1470
        %v1472 = vsel %vm1469, %v1471, %v1467
        %v1473 = vmul.f32 1.0, %v1472
        %v1474 = vrcp.pop %v1434
        %v1475 = vmul.f32 %v1434, %v1474
        %v1476 = vsub.f32 1.0, %v1475
        %v1477 = vmul.f32 %v1474, %v1476
        %v1478 = vadd.f32 %v1474, %v1477
        %vm1479 = vweird.f32 %v1434
        %vm1480 = vweird.f32 %v1474
        %vm1481 = vmor %vm1479, %vm1480
        %v1482 = vsel %vm1481, %v1474, %v1478
        %v1483 = vand.u32 2147483647, %v1434
        %vm1484 = vcmp.eq.f32.partialorder %v1483, 8.507059e+37
        %v1485 = vand.u32 %v1434, 2147483648
        %v1486 = vor.u32 1.1754944e-38, %v1485
        %v1487 = vsel %vm1484, %v1486, %v1482
        %v1488 = vmul.f32 1.0, %v1487
        %v1489 = vrcp.pop %v1435
        %v1490 = vmul.f32 %v1435, %v1489
        %v1491 = vsub.f32 1.0, %v1490
        %v1492 = vmul.f32 %v1489, %v1491
        %v1493 = vadd.f32 %v1489, %v1492
        %vm1494 = vweird.f32 %v1435
        %vm1495 = vweird.f32 %v1489
        %vm1496 = vmor %vm1494, %vm1495
        %v1497 = vsel %vm1496, %v1489, %v1493
        %v1498 = vand.u32 2147483647, %v1435
        %vm1499 = vcmp.eq.f32.partialorder %v1498, 8.507059e+37
        %v1500 = vand.u32 %v1435, 2147483648
        %v1501 = vor.u32 1.1754944e-38, %v1500
        %v1502 = vsel %vm1499, %v1501, %v1497
        %v1503 = vmul.f32 1.0, %v1502
        %v1504 = vrcp.pop %v1436
        %v1505 = vmul.f32 %v1436, %v1504
        %v1506 = vsub.f32 1.0, %v1505
        %v1507 = vmul.f32 %v1504, %v1506
        %v1508 = vadd.f32 %v1504, %v1507
        %vm1509 = vweird.f32 %v1436
        %vm1510 = vweird.f32 %v1504
        %vm1511 = vmor %vm1509, %vm1510
        %v1512 = vsel %vm1511, %v1504, %v1508
        %v1513 = vand.u32 2147483647, %v1436
        %vm1514 = vcmp.eq.f32.partialorder %v1513, 8.507059e+37
        %v1515 = vand.u32 %v1436, 2147483648
        %v1516 = vor.u32 1.1754944e-38, %v1515
        %v1517 = vsel %vm1514, %v1516, %v1512
        %v1518 = vmul.f32 1.0, %v1517
        %v1519 = vrcp.pop %v1437
        %v1520 = vmul.f32 %v1437, %v1519
        %v1521 = vsub.f32 1.0, %v1520
        %v1522 = vmul.f32 %v1519, %v1521
        %v1523 = vadd.f32 %v1519, %v1522
        %vm1524 = vweird.f32 %v1437
        %vm1525 = vweird.f32 %v1519
        %vm1526 = vmor %vm1524, %vm1525
        %v1527 = vsel %vm1526, %v1519, %v1523
        %v1528 = vand.u32 2147483647, %v1437
        %vm1529 = vcmp.eq.f32.partialorder %v1528, 8.507059e+37
        %v1530 = vand.u32 %v1437, 2147483648
        %v1531 = vor.u32 1.1754944e-38, %v1530
        %v1532 = vsel %vm1529, %v1531, %v1527
        %v1533 = vmul.f32 1.0, %v1532
        %v1534 = vrcp.pop %v1438
        %v1535 = vmul.f32 %v1438, %v1534
        %v1536 = vsub.f32 1.0, %v1535
        %v1537 = vmul.f32 %v1534, %v1536
        %v1538 = vadd.f32 %v1534, %v1537
        %vm1539 = vweird.f32 %v1438
        %vm1540 = vweird.f32 %v1534
        %vm1541 = vmor %vm1539, %vm1540
        %v1542 = vsel %vm1541, %v1534, %v1538
        %v1543 = vand.u32 2147483647, %v1438
        %vm1544 = vcmp.eq.f32.partialorder %v1543, 8.507059e+37
        %v1545 = vand.u32 %v1438, 2147483648
        %v1546 = vor.u32 1.1754944e-38, %v1545
        %v1547 = vsel %vm1544, %v1546, %v1542
        %v1548 = vmul.f32 1.0, %v1547
        %v1549 = vrcp.pop %v1439
        %v1550 = vmul.f32 %v1439, %v1549
        %v1551 = vsub.f32 1.0, %v1550
        %v1552 = vmul.f32 %v1549, %v1551
        %v1553 = vadd.f32 %v1549, %v1552
        %vm1554 = vweird.f32 %v1439
        %vm1555 = vweird.f32 %v1549
        %vm1556 = vmor %vm1554, %vm1555
        %v1557 = vsel %vm1556, %v1549, %v1553
        %v1558 = vand.u32 2147483647, %v1439
        %vm1559 = vcmp.eq.f32.partialorder %v1558, 8.507059e+37
        %v1560 = vand.u32 %v1439, 2147483648
        %v1561 = vor.u32 1.1754944e-38, %v1560
        %v1562 = vsel %vm1559, %v1561, %v1557
        %v1563 = vmul.f32 1.0, %v1562
        %v1564 = vrcp.pop %v1440
        %v1565 = vmul.f32 %v1440, %v1564
        %v1566 = vsub.f32 1.0, %v1565
        %v1567 = vmul.f32 %v1564, %v1566
        %v1568 = vadd.f32 %v1564, %v1567
        %vm1569 = vweird.f32 %v1440
        %vm1570 = vweird.f32 %v1564
        %vm1571 = vmor %vm1569, %vm1570
        %v1572 = vsel %vm1571, %v1564, %v1568
        %v1573 = vand.u32 2147483647, %v1440
        %vm1574 = vcmp.eq.f32.partialorder %v1573, 8.507059e+37
        %v1575 = vand.u32 %v1440, 2147483648
        %v1576 = vor.u32 1.1754944e-38, %v1575
        %v1577 = vsel %vm1574, %v1576, %v1572
        %v1578 = vmul.f32 1.0, %v1577
        %v1579 = vrcp.pop %v1441
        %v1580 = vmul.f32 %v1441, %v1579
        %v1581 = vsub.f32 1.0, %v1580
        %v1582 = vmul.f32 %v1579, %v1581
        %v1583 = vadd.f32 %v1579, %v1582
        %vm1584 = vweird.f32 %v1441
        %vm1585 = vweird.f32 %v1579
        %vm1586 = vmor %vm1584, %vm1585
        %v1587 = vsel %vm1586, %v1579, %v1583
        %v1588 = vand.u32 2147483647, %v1441
        %vm1589 = vcmp.eq.f32.partialorder %v1588, 8.507059e+37
        %v1590 = vand.u32 %v1441, 2147483648
        %v1591 = vor.u32 1.1754944e-38, %v1590
        %v1592 = vsel %vm1589, %v1591, %v1587
        %v1593 = vmul.f32 1.0, %v1592
        %v1594 = vrcp.pop %v1442
        %v1595 = vmul.f32 %v1442, %v1594
        %v1596 = vsub.f32 1.0, %v1595
        %v1597 = vmul.f32 %v1594, %v1596
        %v1598 = vadd.f32 %v1594, %v1597
        %vm1599 = vweird.f32 %v1442
        %vm1600 = vweird.f32 %v1594
        %vm1601 = vmor %vm1599, %vm1600
        %v1602 = vsel %vm1601, %v1594, %v1598
        %v1603 = vand.u32 2147483647, %v1442
        %vm1604 = vcmp.eq.f32.partialorder %v1603, 8.507059e+37
        %v1605 = vand.u32 %v1442, 2147483648
        %v1606 = vor.u32 1.1754944e-38, %v1605
        %v1607 = vsel %vm1604, %v1606, %v1602
        %v1608 = vmul.f32 1.0, %v1607
        %v1609 = vrcp.pop %v1443
        %v1610 = vmul.f32 %v1443, %v1609
        %v1611 = vsub.f32 1.0, %v1610
        %v1612 = vmul.f32 %v1609, %v1611
        %v1613 = vadd.f32 %v1609, %v1612
        %vm1614 = vweird.f32 %v1443
        %vm1615 = vweird.f32 %v1609
        %vm1616 = vmor %vm1614, %vm1615
        %v1617 = vsel %vm1616, %v1609, %v1613
        %v1618 = vand.u32 2147483647, %v1443
        %vm1619 = vcmp.eq.f32.partialorder %v1618, 8.507059e+37
        %v1620 = vand.u32 %v1443, 2147483648
        %v1621 = vor.u32 1.1754944e-38, %v1620
        %v1622 = vsel %vm1619, %v1621, %v1617
        %v1623 = vmul.f32 1.0, %v1622
        %v1624 = vtanh.pop %v1392
        %v1625 = vtanh.pop %v1393
        %v1626 = vtanh.pop %v1394
        %v1627 = vtanh.pop %v1395
        %v1628 = vmul.f32 %v1518, %v1243
        %v1629 = vmul.f32 %v1533, %v1244
        %v1630 = vmul.f32 %v1548, %v1245
        %v1631 = vmul.f32 %v1563, %v1246
        %v1632 = vmul.f32 %v1458, %v1624
        %v1633 = vmul.f32 %v1473, %v1625
        %v1634 = vmul.f32 %v1488, %v1626
        %v1635 = vmul.f32 %v1503, %v1627
        %v1636 = vadd.f32 %v1628, %v1632
        %v1637 = vadd.f32 %v1629, %v1633
        %v1638 = vadd.f32 %v1630, %v1634
        %v1639 = vadd.f32 %v1631, %v1635
        %v1640 = vtanh.pop %v1636
        %v1641 = vtanh.pop %v1637
        %v1642 = vtanh.pop %v1638
        %v1643 = vtanh.pop %v1639
        %v1644 = vmul.f32 %v1578, %v1640
        %v1645 = vmul.f32 %v1593, %v1641
        %v1646 = vmul.f32 %v1608, %v1642
        %v1647 = vmul.f32 %v1623, %v1643
        %s1648 = sadd.s32 %s365, 2
        %v1649 = vstv %s1648
        %vm1650 = vcmp.lt.s32.totalorder %v1649, %v364
        %v1651 = vsel %vm1650, 1, 0
        %v1652 = vperm.slane %v1651, 0
        %vm1653 = vcmp.eq.s32.totalorder %v1652, 1
        %v1654 = vsel %vm1653, %v1644, %v1239
        %v1655 = vsel %vm1653, %v1645, %v1240
        %v1656 = vsel %vm1653, %v1646, %v1241
        %v1657 = vsel %vm1653, %v1647, %v1242
        %v1658 = vsel %vm1653, %v1636, %v1243
        %v1659 = vsel %vm1653, %v1637, %v1244
        %v1660 = vsel %vm1653, %v1638, %v1245
        %v1661 = vsel %vm1653, %v1639, %v1246
        %v1662 = vsel %vm1653, %v1644, 0.0
        %v1663 = vsel %vm1653, %v1645, 0.0
        %v1664 = vsel %vm1653, %v1646, 0.0
        %v1665 = vsel %vm1653, %v1647, 0.0
        %v1666 = vpack.c.bf16 %v1663, %v1662
        %v1667 = vpack.c.bf16 %v1665, %v1664
        %1668 = vmatpush.bf16.msra.mxu0 0
        %1669 = vmatpush.bf16.msra.mxu0 0
        %1670 = vmatpush.bf16.msra.mxu0 0
        %1671 = vmatpush.bf16.msra.mxu0 0
        %1672 = vmatpush.bf16.msra.mxu0 0
        %1673 = vmatpush.bf16.msra.mxu0 0
        %1674 = vmatpush.bf16.msra.mxu0 %v1667
        %1675 = vmatpush.bf16.msra.mxu0 %v1666
        %1676 = vmatmul.bf16.gmra.mxu0 %v824
        %v1677 = vpop.f32.mrf.mxu0
        %v1678 = vadd.f32 %v796, %v1677
        %v1679 = vpop.f32.mrf.mxu0
        %v1680 = vadd.f32 %v801, %v1679
        %1681 = vmatmul.bf16.gmra.mxu0 %v827
        %v1682 = vpop.f32.mrf.mxu0
        %v1683 = vadd.f32 %v806, %v1682
        %v1684 = vpop.f32.mrf.mxu0
        %v1685 = vadd.f32 %v811, %v1684
        %1686 = vdwg.mxu0
        %v1687 = vmax.f32 %v1678, 0.0
        %v1688 = vmax.f32 %v1680, 0.0
        %v1689 = vmax.f32 %v1683, 0.0
        %v1690 = vmax.f32 %v1685, 0.0
        %v1691 = vpack.c.bf16 %v1688, %v1687
        %v1692 = vpack.c.bf16 %v1690, %v1689
        %1693 = vmatpush.bf16.msra.mxu0 0
        %1694 = vmatpush.bf16.msra.mxu0 0
        %1695 = vmatpush.bf16.msra.mxu0 0
        %1696 = vmatpush.bf16.msra.mxu0 0
        %1697 = vmatpush.bf16.msra.mxu0 0
        %1698 = vmatpush.bf16.msra.mxu0 0
        %1699 = vmatpush.bf16.msra.mxu0 %v1692
        %1700 = vmatpush.bf16.msra.mxu0 %v1691
        %1701 = vmatmul.bf16.gmra.mxu0 %v861
        %v1702 = vpop.f32.mrf.mxu0
        %v1703 = vadd.f32 %v859, %v1702
        %v1704 = vpop.f32.mrf.mxu0
        %1705 = vdwg.mxu0
        %v1706 = vxor.u32 %v1703, 2147483648
        %v1707 = vmul.f32 %v1706, 1.442695
        %v1708 = vpow.pop %v1707
        %v1709 = vadd.f32 %v1708, 1.0
        %v1710 = vrcp.pop %v1709
        %v1711 = vmul.f32 %v1709, %v1710
        %v1712 = vsub.f32 1.0, %v1711
        %v1713 = vmul.f32 %v1710, %v1712
        %v1714 = vadd.f32 %v1710, %v1713
        %vm1715 = vweird.f32 %v1709
        %vm1716 = vweird.f32 %v1710
        %vm1717 = vmor %vm1715, %vm1716
        %v1718 = vsel %vm1717, %v1710, %v1714
        %v1719 = vand.u32 2147483647, %v1709
        %vm1720 = vcmp.eq.f32.partialorder %v1719, 8.507059e+37
        %v1721 = vand.u32 %v1709, 2147483648
        %v1722 = vor.u32 1.1754944e-38, %v1721
        %v1723 = vsel %vm1720, %v1722, %v1718
        %v1724 = vmul.f32 1.0, %v1723
        %s1725 = scalar_lea.vmem %s309, 2 [#allocation5]
        %1726 = vst.msk [vmem:[%s1725] sm:$0x1] %vm895, %v1724
        %s1727 = scalar_lea.vmem %s321, 384
        %v1728 = vld [vmem:[%s1727] sm:$0xff]
        %v1729 = vld [vmem:[%s1727 + $0x8] sm:$0xff]
        %v1730 = vld [vmem:[%s1727 + $0x10] sm:$0xff]
        %v1731 = vld [vmem:[%s1727 + $0x18] sm:$0xff]
        %v1732 = vld [vmem:[%s1727 + $0x20] sm:$0xff]
        %v1733 = vld [vmem:[%s1727 + $0x28] sm:$0xff]
        %v1734 = vld [vmem:[%s1727 + $0x30] sm:$0xff]
        %v1735 = vld [vmem:[%s1727 + $0x38] sm:$0xff]
        %v1736 = vld [vmem:[%s1727 + $0x40] sm:$0xff]
        %v1737 = vld [vmem:[%s1727 + $0x48] sm:$0xff]
        %v1738 = vld [vmem:[%s1727 + $0x50] sm:$0xff]
        %v1739 = vld [vmem:[%s1727 + $0x58] sm:$0xff]
        %v1740 = vld [vmem:[%s1727 + $0x60] sm:$0xff]
        %v1741 = vld [vmem:[%s1727 + $0x68] sm:$0xff]
        %v1742 = vld [vmem:[%s1727 + $0x70] sm:$0xff]
        %v1743 = vld [vmem:[%s1727 + $0x78] sm:$0xff]
        %v1744 = vpack.c.bf16 %v1655, %v1654
        %v1745 = vpack.c.bf16 %v1657, %v1656
        %1746 = vmatpush.bf16.msra.mxu0 0
        %1747 = vmatpush.bf16.msra.mxu0 0
        %1748 = vmatpush.bf16.msra.mxu0 0
        %1749 = vmatpush.bf16.msra.mxu0 0
        %1750 = vmatpush.bf16.msra.mxu0 0
        %1751 = vmatpush.bf16.msra.mxu0 0
        %1752 = vmatpush.bf16.msra.mxu0 %v1745
        %1753 = vmatpush.bf16.msra.mxu0 %v1744
        %1754 = vmatmul.bf16.gmra.mxu0 %v434
        %v1755 = vpop.f32.mrf.mxu0
        %v1756 = vadd.f32 0.0, %v1755
        %v1757 = vpop.f32.mrf.mxu0
        %v1758 = vadd.f32 0.0, %v1757
        %1759 = vmatmul.bf16.gmra.mxu0 %v437
        %v1760 = vpop.f32.mrf.mxu0
        %v1761 = vadd.f32 0.0, %v1760
        %v1762 = vpop.f32.mrf.mxu0
        %v1763 = vadd.f32 0.0, %v1762
        %1764 = vmatmul.bf16.gmra.mxu0 %v440
        %v1765 = vpop.f32.mrf.mxu0
        %v1766 = vadd.f32 0.0, %v1765
        %v1767 = vpop.f32.mrf.mxu0
        %v1768 = vadd.f32 0.0, %v1767
        %1769 = vmatmul.bf16.gmra.mxu0 %v443
        %v1770 = vpop.f32.mrf.mxu0
        %v1771 = vadd.f32 0.0, %v1770
        %v1772 = vpop.f32.mrf.mxu0
        %v1773 = vadd.f32 0.0, %v1772
        %1774 = vmatmul.bf16.gmra.mxu0 %v446
        %v1775 = vpop.f32.mrf.mxu0
        %v1776 = vadd.f32 0.0, %v1775
        %v1777 = vpop.f32.mrf.mxu0
        %v1778 = vadd.f32 0.0, %v1777
        %1779 = vmatmul.bf16.gmra.mxu0 %v449
        %v1780 = vpop.f32.mrf.mxu0
        %v1781 = vadd.f32 0.0, %v1780
        %v1782 = vpop.f32.mrf.mxu0
        %v1783 = vadd.f32 0.0, %v1782
        %1784 = vmatmul.bf16.gmra.mxu0 %v452
        %v1785 = vpop.f32.mrf.mxu0
        %v1786 = vadd.f32 0.0, %v1785
        %v1787 = vpop.f32.mrf.mxu0
        %v1788 = vadd.f32 0.0, %v1787
        %1789 = vmatmul.bf16.gmra.mxu0 %v455
        %v1790 = vpop.f32.mrf.mxu0
        %v1791 = vadd.f32 0.0, %v1790
        %v1792 = vpop.f32.mrf.mxu0
        %v1793 = vadd.f32 0.0, %v1792
        %1794 = vdwg.mxu0
        %v1795 = vadd.f32 %v1728, %v1756
        %v1796 = vadd.f32 %v1729, %v1758
        %v1797 = vadd.f32 %v1730, %v1761
        %v1798 = vadd.f32 %v1731, %v1763
        %v1799 = vadd.f32 %v1732, %v1766
        %v1800 = vadd.f32 %v1733, %v1768
        %v1801 = vadd.f32 %v1734, %v1771
        %v1802 = vadd.f32 %v1735, %v1773
        %v1803 = vadd.f32 %v1736, %v1776
        %v1804 = vadd.f32 %v1737, %v1778
        %v1805 = vadd.f32 %v1738, %v1781
        %v1806 = vadd.f32 %v1739, %v1783
        %v1807 = vadd.f32 %v1740, %v1786
        %v1808 = vadd.f32 %v1741, %v1788
        %v1809 = vadd.f32 %v1742, %v1791
        %v1810 = vadd.f32 %v1743, %v1793
        %v1811 = vxor.u32 %v1795, 2147483648
        %v1812 = vxor.u32 %v1796, 2147483648
        %v1813 = vxor.u32 %v1797, 2147483648
        %v1814 = vxor.u32 %v1798, 2147483648
        %v1815 = vxor.u32 %v1799, 2147483648
        %v1816 = vxor.u32 %v1800, 2147483648
        %v1817 = vxor.u32 %v1801, 2147483648
        %v1818 = vxor.u32 %v1802, 2147483648
        %v1819 = vxor.u32 %v1803, 2147483648
        %v1820 = vxor.u32 %v1804, 2147483648
        %v1821 = vxor.u32 %v1805, 2147483648
        %v1822 = vxor.u32 %v1806, 2147483648
        %v1823 = vmul.f32 %v1811, 1.442695
        %v1824 = vpow.pop %v1823
        %v1825 = vmul.f32 %v1812, 1.442695
        %v1826 = vpow.pop %v1825
        %v1827 = vmul.f32 %v1813, 1.442695
        %v1828 = vpow.pop %v1827
        %v1829 = vmul.f32 %v1814, 1.442695
        %v1830 = vpow.pop %v1829
        %v1831 = vmul.f32 %v1815, 1.442695
        %v1832 = vpow.pop %v1831
        %v1833 = vmul.f32 %v1816, 1.442695
        %v1834 = vpow.pop %v1833
        %v1835 = vmul.f32 %v1817, 1.442695
        %v1836 = vpow.pop %v1835
        %v1837 = vmul.f32 %v1818, 1.442695
        %v1838 = vpow.pop %v1837
        %v1839 = vmul.f32 %v1819, 1.442695
        %v1840 = vpow.pop %v1839
        %v1841 = vmul.f32 %v1820, 1.442695
        %v1842 = vpow.pop %v1841
        %v1843 = vmul.f32 %v1821, 1.442695
        %v1844 = vpow.pop %v1843
        %v1845 = vmul.f32 %v1822, 1.442695
        %v1846 = vpow.pop %v1845
        %v1847 = vadd.f32 %v1824, 1.0
        %v1848 = vadd.f32 %v1826, 1.0
        %v1849 = vadd.f32 %v1828, 1.0
        %v1850 = vadd.f32 %v1830, 1.0
        %v1851 = vadd.f32 %v1832, 1.0
        %v1852 = vadd.f32 %v1834, 1.0
        %v1853 = vadd.f32 %v1836, 1.0
        %v1854 = vadd.f32 %v1838, 1.0
        %v1855 = vadd.f32 %v1840, 1.0
        %v1856 = vadd.f32 %v1842, 1.0
        %v1857 = vadd.f32 %v1844, 1.0
        %v1858 = vadd.f32 %v1846, 1.0
        %v1859 = vrcp.pop %v1847
        %v1860 = vmul.f32 %v1847, %v1859
        %v1861 = vsub.f32 1.0, %v1860
        %v1862 = vmul.f32 %v1859, %v1861
        %v1863 = vadd.f32 %v1859, %v1862
        %vm1864 = vweird.f32 %v1847
        %vm1865 = vweird.f32 %v1859
        %vm1866 = vmor %vm1864, %vm1865
        %v1867 = vsel %vm1866, %v1859, %v1863
        %v1868 = vand.u32 2147483647, %v1847
        %vm1869 = vcmp.eq.f32.partialorder %v1868, 8.507059e+37
        %v1870 = vand.u32 %v1847, 2147483648
        %v1871 = vor.u32 1.1754944e-38, %v1870
        %v1872 = vsel %vm1869, %v1871, %v1867
        %v1873 = vmul.f32 1.0, %v1872
        %v1874 = vrcp.pop %v1848
        %v1875 = vmul.f32 %v1848, %v1874
        %v1876 = vsub.f32 1.0, %v1875
        %v1877 = vmul.f32 %v1874, %v1876
        %v1878 = vadd.f32 %v1874, %v1877
        %vm1879 = vweird.f32 %v1848
        %vm1880 = vweird.f32 %v1874
        %vm1881 = vmor %vm1879, %vm1880
        %v1882 = vsel %vm1881, %v1874, %v1878
        %v1883 = vand.u32 2147483647, %v1848
        %vm1884 = vcmp.eq.f32.partialorder %v1883, 8.507059e+37
        %v1885 = vand.u32 %v1848, 2147483648
        %v1886 = vor.u32 1.1754944e-38, %v1885
        %v1887 = vsel %vm1884, %v1886, %v1882
        %v1888 = vmul.f32 1.0, %v1887
        %v1889 = vrcp.pop %v1849
        %v1890 = vmul.f32 %v1849, %v1889
        %v1891 = vsub.f32 1.0, %v1890
        %v1892 = vmul.f32 %v1889, %v1891
        %v1893 = vadd.f32 %v1889, %v1892
        %vm1894 = vweird.f32 %v1849
        %vm1895 = vweird.f32 %v1889
        %vm1896 = vmor %vm1894, %vm1895
        %v1897 = vsel %vm1896, %v1889, %v1893
        %v1898 = vand.u32 2147483647, %v1849
        %vm1899 = vcmp.eq.f32.partialorder %v1898, 8.507059e+37
        %v1900 = vand.u32 %v1849, 2147483648
        %v1901 = vor.u32 1.1754944e-38, %v1900
        %v1902 = vsel %vm1899, %v1901, %v1897
        %v1903 = vmul.f32 1.0, %v1902
        %v1904 = vrcp.pop %v1850
        %v1905 = vmul.f32 %v1850, %v1904
        %v1906 = vsub.f32 1.0, %v1905
        %v1907 = vmul.f32 %v1904, %v1906
        %v1908 = vadd.f32 %v1904, %v1907
        %vm1909 = vweird.f32 %v1850
        %vm1910 = vweird.f32 %v1904
        %vm1911 = vmor %vm1909, %vm1910
        %v1912 = vsel %vm1911, %v1904, %v1908
        %v1913 = vand.u32 2147483647, %v1850
        %vm1914 = vcmp.eq.f32.partialorder %v1913, 8.507059e+37
        %v1915 = vand.u32 %v1850, 2147483648
        %v1916 = vor.u32 1.1754944e-38, %v1915
        %v1917 = vsel %vm1914, %v1916, %v1912
        %v1918 = vmul.f32 1.0, %v1917
        %v1919 = vrcp.pop %v1851
        %v1920 = vmul.f32 %v1851, %v1919
        %v1921 = vsub.f32 1.0, %v1920
        %v1922 = vmul.f32 %v1919, %v1921
        %v1923 = vadd.f32 %v1919, %v1922
        %vm1924 = vweird.f32 %v1851
        %vm1925 = vweird.f32 %v1919
        %vm1926 = vmor %vm1924, %vm1925
        %v1927 = vsel %vm1926, %v1919, %v1923
        %v1928 = vand.u32 2147483647, %v1851
        %vm1929 = vcmp.eq.f32.partialorder %v1928, 8.507059e+37
        %v1930 = vand.u32 %v1851, 2147483648
        %v1931 = vor.u32 1.1754944e-38, %v1930
        %v1932 = vsel %vm1929, %v1931, %v1927
        %v1933 = vmul.f32 1.0, %v1932
        %v1934 = vrcp.pop %v1852
        %v1935 = vmul.f32 %v1852, %v1934
        %v1936 = vsub.f32 1.0, %v1935
        %v1937 = vmul.f32 %v1934, %v1936
        %v1938 = vadd.f32 %v1934, %v1937
        %vm1939 = vweird.f32 %v1852
        %vm1940 = vweird.f32 %v1934
        %vm1941 = vmor %vm1939, %vm1940
        %v1942 = vsel %vm1941, %v1934, %v1938
        %v1943 = vand.u32 2147483647, %v1852
        %vm1944 = vcmp.eq.f32.partialorder %v1943, 8.507059e+37
        %v1945 = vand.u32 %v1852, 2147483648
        %v1946 = vor.u32 1.1754944e-38, %v1945
        %v1947 = vsel %vm1944, %v1946, %v1942
        %v1948 = vmul.f32 1.0, %v1947
        %v1949 = vrcp.pop %v1853
        %v1950 = vmul.f32 %v1853, %v1949
        %v1951 = vsub.f32 1.0, %v1950
        %v1952 = vmul.f32 %v1949, %v1951
        %v1953 = vadd.f32 %v1949, %v1952
        %vm1954 = vweird.f32 %v1853
        %vm1955 = vweird.f32 %v1949
        %vm1956 = vmor %vm1954, %vm1955
        %v1957 = vsel %vm1956, %v1949, %v1953
        %v1958 = vand.u32 2147483647, %v1853
        %vm1959 = vcmp.eq.f32.partialorder %v1958, 8.507059e+37
        %v1960 = vand.u32 %v1853, 2147483648
        %v1961 = vor.u32 1.1754944e-38, %v1960
        %v1962 = vsel %vm1959, %v1961, %v1957
        %v1963 = vmul.f32 1.0, %v1962
        %v1964 = vrcp.pop %v1854
        %v1965 = vmul.f32 %v1854, %v1964
        %v1966 = vsub.f32 1.0, %v1965
        %v1967 = vmul.f32 %v1964, %v1966
        %v1968 = vadd.f32 %v1964, %v1967
        %vm1969 = vweird.f32 %v1854
        %vm1970 = vweird.f32 %v1964
        %vm1971 = vmor %vm1969, %vm1970
        %v1972 = vsel %vm1971, %v1964, %v1968
        %v1973 = vand.u32 2147483647, %v1854
        %vm1974 = vcmp.eq.f32.partialorder %v1973, 8.507059e+37
        %v1975 = vand.u32 %v1854, 2147483648
        %v1976 = vor.u32 1.1754944e-38, %v1975
        %v1977 = vsel %vm1974, %v1976, %v1972
        %v1978 = vmul.f32 1.0, %v1977
        %v1979 = vrcp.pop %v1855
        %v1980 = vmul.f32 %v1855, %v1979
        %v1981 = vsub.f32 1.0, %v1980
        %v1982 = vmul.f32 %v1979, %v1981
        %v1983 = vadd.f32 %v1979, %v1982
        %vm1984 = vweird.f32 %v1855
        %vm1985 = vweird.f32 %v1979
        %vm1986 = vmor %vm1984, %vm1985
        %v1987 = vsel %vm1986, %v1979, %v1983
        %v1988 = vand.u32 2147483647, %v1855
        %vm1989 = vcmp.eq.f32.partialorder %v1988, 8.507059e+37
        %v1990 = vand.u32 %v1855, 2147483648
        %v1991 = vor.u32 1.1754944e-38, %v1990
        %v1992 = vsel %vm1989, %v1991, %v1987
        %v1993 = vmul.f32 1.0, %v1992
        %v1994 = vrcp.pop %v1856
        %v1995 = vmul.f32 %v1856, %v1994
        %v1996 = vsub.f32 1.0, %v1995
        %v1997 = vmul.f32 %v1994, %v1996
        %v1998 = vadd.f32 %v1994, %v1997
        %vm1999 = vweird.f32 %v1856
        %vm2000 = vweird.f32 %v1994
        %vm2001 = vmor %vm1999, %vm2000
        %v2002 = vsel %vm2001, %v1994, %v1998
        %v2003 = vand.u32 2147483647, %v1856
        %vm2004 = vcmp.eq.f32.partialorder %v2003, 8.507059e+37
        %v2005 = vand.u32 %v1856, 2147483648
        %v2006 = vor.u32 1.1754944e-38, %v2005
        %v2007 = vsel %vm2004, %v2006, %v2002
        %v2008 = vmul.f32 1.0, %v2007
        %v2009 = vrcp.pop %v1857
        %v2010 = vmul.f32 %v1857, %v2009
        %v2011 = vsub.f32 1.0, %v2010
        %v2012 = vmul.f32 %v2009, %v2011
        %v2013 = vadd.f32 %v2009, %v2012
        %vm2014 = vweird.f32 %v1857
        %vm2015 = vweird.f32 %v2009
        %vm2016 = vmor %vm2014, %vm2015
        %v2017 = vsel %vm2016, %v2009, %v2013
        %v2018 = vand.u32 2147483647, %v1857
        %vm2019 = vcmp.eq.f32.partialorder %v2018, 8.507059e+37
        %v2020 = vand.u32 %v1857, 2147483648
        %v2021 = vor.u32 1.1754944e-38, %v2020
        %v2022 = vsel %vm2019, %v2021, %v2017
        %v2023 = vmul.f32 1.0, %v2022
        %v2024 = vrcp.pop %v1858
        %v2025 = vmul.f32 %v1858, %v2024
        %v2026 = vsub.f32 1.0, %v2025
        %v2027 = vmul.f32 %v2024, %v2026
        %v2028 = vadd.f32 %v2024, %v2027
        %vm2029 = vweird.f32 %v1858
        %vm2030 = vweird.f32 %v2024
        %vm2031 = vmor %vm2029, %vm2030
        %v2032 = vsel %vm2031, %v2024, %v2028
        %v2033 = vand.u32 2147483647, %v1858
        %vm2034 = vcmp.eq.f32.partialorder %v2033, 8.507059e+37
        %v2035 = vand.u32 %v1858, 2147483648
        %v2036 = vor.u32 1.1754944e-38, %v2035
        %v2037 = vsel %vm2034, %v2036, %v2032
        %v2038 = vmul.f32 1.0, %v2037
        %v2039 = vtanh.pop %v1807
        %v2040 = vtanh.pop %v1808
        %v2041 = vtanh.pop %v1809
        %v2042 = vtanh.pop %v1810
        %v2043 = vmul.f32 %v1933, %v1658
        %v2044 = vmul.f32 %v1948, %v1659
        %v2045 = vmul.f32 %v1963, %v1660
        %v2046 = vmul.f32 %v1978, %v1661
        %v2047 = vmul.f32 %v1873, %v2039
        %v2048 = vmul.f32 %v1888, %v2040
        %v2049 = vmul.f32 %v1903, %v2041
        %v2050 = vmul.f32 %v1918, %v2042
        %v2051 = vadd.f32 %v2043, %v2047
        %v2052 = vadd.f32 %v2044, %v2048
        %v2053 = vadd.f32 %v2045, %v2049
        %v2054 = vadd.f32 %v2046, %v2050
        %v2055 = vtanh.pop %v2051
        %v2056 = vtanh.pop %v2052
        %v2057 = vtanh.pop %v2053
        %v2058 = vtanh.pop %v2054
        %v2059 = vmul.f32 %v1993, %v2055
        %v2060 = vmul.f32 %v2008, %v2056
        %v2061 = vmul.f32 %v2023, %v2057
        %v2062 = vmul.f32 %v2038, %v2058
        %s2063 = sadd.s32 %s365, 3
        %v2064 = vstv %s2063
        %vm2065 = vcmp.lt.s32.totalorder %v2064, %v364
        %v2066 = vsel %vm2065, 1, 0
        %v2067 = vperm.slane %v2066, 0
        %vm2068 = vcmp.eq.s32.totalorder %v2067, 1
        %v2069 = vsel %vm2068, %v2059, %v1654
        %v2070 = vsel %vm2068, %v2060, %v1655
        %v2071 = vsel %vm2068, %v2061, %v1656
        %v2072 = vsel %vm2068, %v2062, %v1657
        %v2073 = vsel %vm2068, %v2051, %v1658
        %v2074 = vsel %vm2068, %v2052, %v1659
        %v2075 = vsel %vm2068, %v2053, %v1660
        %v2076 = vsel %vm2068, %v2054, %v1661
        %v2077 = vsel %vm2068, %v2059, 0.0
        %v2078 = vsel %vm2068, %v2060, 0.0
        %v2079 = vsel %vm2068, %v2061, 0.0
        %v2080 = vsel %vm2068, %v2062, 0.0
        %v2081 = vpack.c.bf16 %v2078, %v2077
        %v2082 = vpack.c.bf16 %v2080, %v2079
        %2083 = vmatpush.bf16.msra.mxu0 0
        %2084 = vmatpush.bf16.msra.mxu0 0
        %2085 = vmatpush.bf16.msra.mxu0 0
        %2086 = vmatpush.bf16.msra.mxu0 0
        %2087 = vmatpush.bf16.msra.mxu0 0
        %2088 = vmatpush.bf16.msra.mxu0 0
        %2089 = vmatpush.bf16.msra.mxu0 %v2082
        %2090 = vmatpush.bf16.msra.mxu0 %v2081
        %2091 = vmatmul.bf16.gmra.mxu0 %v824
        %v2092 = vpop.f32.mrf.mxu0
        %v2093 = vadd.f32 %v796, %v2092
        %v2094 = vpop.f32.mrf.mxu0
        %v2095 = vadd.f32 %v801, %v2094
        %2096 = vmatmul.bf16.gmra.mxu0 %v827
        %v2097 = vpop.f32.mrf.mxu0
        %v2098 = vadd.f32 %v806, %v2097
        %v2099 = vpop.f32.mrf.mxu0
        %v2100 = vadd.f32 %v811, %v2099
        %2101 = vdwg.mxu0
        %v2102 = vmax.f32 %v2093, 0.0
        %v2103 = vmax.f32 %v2095, 0.0
        %v2104 = vmax.f32 %v2098, 0.0
        %v2105 = vmax.f32 %v2100, 0.0
        %v2106 = vpack.c.bf16 %v2103, %v2102
        %v2107 = vpack.c.bf16 %v2105, %v2104
        %2108 = vmatpush.bf16.msra.mxu0 0
        %2109 = vmatpush.bf16.msra.mxu0 0
        %2110 = vmatpush.bf16.msra.mxu0 0
        %2111 = vmatpush.bf16.msra.mxu0 0
        %2112 = vmatpush.bf16.msra.mxu0 0
        %2113 = vmatpush.bf16.msra.mxu0 0
        %2114 = vmatpush.bf16.msra.mxu0 %v2107
        %2115 = vmatpush.bf16.msra.mxu0 %v2106
        %2116 = vmatmul.bf16.gmra.mxu0 %v861
        %v2117 = vpop.f32.mrf.mxu0
        %v2118 = vadd.f32 %v859, %v2117
        %v2119 = vpop.f32.mrf.mxu0
        %2120 = vdwg.mxu0
        %v2121 = vxor.u32 %v2118, 2147483648
        %v2122 = vmul.f32 %v2121, 1.442695
        %v2123 = vpow.pop %v2122
        %v2124 = vadd.f32 %v2123, 1.0
        %v2125 = vrcp.pop %v2124
        %v2126 = vmul.f32 %v2124, %v2125
        %v2127 = vsub.f32 1.0, %v2126
        %v2128 = vmul.f32 %v2125, %v2127
        %v2129 = vadd.f32 %v2125, %v2128
        %vm2130 = vweird.f32 %v2124
        %vm2131 = vweird.f32 %v2125
        %vm2132 = vmor %vm2130, %vm2131
        %v2133 = vsel %vm2132, %v2125, %v2129
        %v2134 = vand.u32 2147483647, %v2124
        %vm2135 = vcmp.eq.f32.partialorder %v2134, 8.507059e+37
        %v2136 = vand.u32 %v2124, 2147483648
        %v2137 = vor.u32 1.1754944e-38, %v2136
        %v2138 = vsel %vm2135, %v2137, %v2133
        %v2139 = vmul.f32 1.0, %v2138
        %s2140 = scalar_lea.vmem %s309, 3 [#allocation5]
        %2141 = vst.msk [vmem:[%s2140] sm:$0x1] %vm895, %v2139
        %vm2142 = vcmask 64512
        %2143 = vst.msk [vmem:[#allocation2] sm:$0xff] %vm2142, %v2069
        %2144 = vst.msk [vmem:[#allocation2 + $0x8] sm:$0xff] %vm2142, %v2070
        %2145 = vst.msk [vmem:[#allocation2 + $0x10] sm:$0xff] %vm2142, %v2071
        %2146 = vst.msk [vmem:[#allocation2 + $0x18] sm:$0xff] %vm2142, %v2072
        %2147 = vst.msk [vmem:[#allocation3] sm:$0xff] %vm2142, %v2073
        %2148 = vst.msk [vmem:[#allocation3 + $0x8] sm:$0xff] %vm2142, %v2074
        %2149 = vst.msk [vmem:[#allocation3 + $0x10] sm:$0xff] %vm2142, %v2075
        %2150 = vst.msk [vmem:[#allocation3 + $0x18] sm:$0xff] %vm2142, %v2076
        %s2151 = sand.u32 %s204, 1
        %s2152 = scalar_lea.sflag [#allocation6], %s2151
        %s2153 = sand.u32 %s204, 1
        %s2154 = smul.addr %s2153, 4
        %s2155 = scalar_lea.vmem [#allocation5], %s2154
        // Predicated region
        $region53: #{tpu_custom_call.1} parent=47 // pred_check
          %p2156 = pneg %p214
        $region54: #{tpu_custom_call.1} parent=47 // pred_check_branch
          %2158 = sbr.rel (%p2156) target = $region56
        $region55: #{tpu_custom_call.1} parent=47 // pred_region
          %s2159 = smul.u32 4, %s28
          %2161 = vsyncadd %s2152, 0
          %s2162 = sadd.s32 %s27, %s2159
          %s2163 = scalar_lea.hbm %s7, %s2162
          %s2164 = sshll.u32 %s2155, 4
          %s2165 = int_to_ptr.vmem [resolvable:$true] %s2164
          %s2166 = sshll.u32 %s2163, 4
          %s2167 = int_to_ptr.hbm [resolvable:$true] %s2166
          %2172 = dma.vmem_to_hbm [thread:$0]  %s2165, 64, %s2167, %s2152, 16, 16, 1
        $region56: #{tpu_custom_call.1} parent=47 // pred_fallthru
          _
      $region48: #{tpu_custom_call.1} parent=5 // pred_fallthru
        _
      %p2173 = scmp.le.s32.totalorder 2, %s18
      // Predicated region
      $region57: #{tpu_custom_call.1} parent=5 // pred_check
        %p2174 = pneg %p2173
      $region58: #{tpu_custom_call.1} parent=5 // pred_check_branch
        %2176 = sbr.rel (%p2174) target = $region60
      $region59: #{tpu_custom_call.1} parent=5 // pred_region
        %s2177 = ssub.s32 %s18, 2
        // Predicated region
        $region61: #{tpu_custom_call.1} parent=59 // pred_check
          %p2178 = pneg %p220
        $region62: #{tpu_custom_call.1} parent=59 // pred_check_branch
          %2180 = sbr.rel (%p2178) target = $region64
        $region63: #{tpu_custom_call.1} parent=59 // pred_region
          %s2181 = sand.u32 %s205, 1
          %s2182 = scalar_lea.sflag [#allocation6], %s2181
          %s2183 = sand.u32 %s205, 1
          %s2184 = smul.addr %s2183, 4
          %s2185 = scalar_lea.vmem [#allocation5], %s2184
          %2187 = dma.done %s2182, 64
        $region64: #{tpu_custom_call.1} parent=59 // pred_fallthru
          _
      $region60: #{tpu_custom_call.1} parent=5 // pred_fallthru
        _
    $region6: #{tpu_custom_call.1} parent=1 // loop_footer
      %s22 = sadd.s32 1, %s18
    $region7: #{tpu_custom_call.1} parent=1 // loop_footer_branch
      %17 = sbr.rel target = $region3
    $region8: #{tpu_custom_call.1} parent=1 // loop_exit
      _
    %2188 = vsyncpa [#allocation6], 1
    %s2189 = scalar_lea.sflag [#allocation6], 1
    %2190 = vsyncpa %s2189, 1

</llo_original>
